<compile_context>
chip_gen: v7x
topology: tpu7x:2x2x1
jax: 0.10.0
libtpu: 0.0.40
codegen_flags: <defaults>
</compile_context>

<pallas_src>
import functools

import jax
import jax.numpy as jnp
from jax.experimental import pallas as pl
from jax.experimental.pallas import tpu as pltpu

STEM_C = 32      # EfficientNet-b0 stem output channels (simplified backbone)
FEAT = 512       # base = EfficientNet.from_pretrained(..., num_classes=512)
FC1 = 64
IPD = 2
LANE = 128


def _round_up(x, m):
    return (x + m - 1) // m * m


# ---------------------------------------------------------------------------
# Single fused kernel: stem conv + swish + global avg pool + base fc + head.
# ---------------------------------------------------------------------------
def _fused_fwd_kernel(win_ref, w64_ref, bstem_ref, wbase_ref, bbase_ref,
                      wfc1_ref, bfc1_ref, wip1_ref, bip1_ref,
                      wlast_ref, blast_ref,
                      xout_ref, ip1_ref,
                      pooled_acc,
                      *, oh_tile, oh, ow):
    s = pl.program_id(1)
    ns = pl.num_programs(1)

    @pl.when(s == 0)
    def _init():
        pooled_acc[...] = jnp.zeros_like(pooled_acc)

    # ---- stem conv on this tile: one fused K=64 matmul (windows pre-packed).
    k = w64_ref.shape[0]
    win = win_ref[0].reshape(oh_tile * ow, k)                     # (M, 64) bf16
    conv = jnp.dot(win, w64_ref[...],
                   preferred_element_type=jnp.float32) + bstem_ref[...]
    act = conv * jax.nn.sigmoid(conv)                             # swish via EUP

    # ---- global average pool: partial sums live only in VMEM scratch.
    if oh % oh_tile != 0:
        # Only the last spatial tile contains zero-padded tail rows (where
        # swish(bias) != 0 would pollute the pool); pay the mask only there.
        @pl.when(s == ns - 1)
        def _acc_tail():
            rid = s * oh_tile + jax.lax.broadcasted_iota(jnp.int32, (oh_tile, ow), 0)
            masked = jnp.where((rid < oh).reshape(oh_tile * ow, 1), act, 0.0)
            pooled_acc[...] += jnp.sum(masked, axis=0, keepdims=True)

        @pl.when(s != ns - 1)
        def _acc_body():
            pooled_acc[...] += jnp.sum(act, axis=0, keepdims=True)
    else:
        pooled_acc[...] += jnp.sum(act, axis=0, keepdims=True)

    # ---- finalize: pooled -> base fc -> fc_1 -> (dropout = id) -> ip1 -> fc_last
    @pl.when(s == ns - 1)
    def _finalize():
        pooled = pooled_acc[...] * (1.0 / float(oh * ow))         # (1, 32) f32
        feats = jnp.dot(pooled.astype(jnp.bfloat16), wbase_ref[...],
                        preferred_element_type=jnp.float32) + bbase_ref[...]
        h = jnp.dot(feats.astype(jnp.bfloat16), wfc1_ref[...],
                    preferred_element_type=jnp.float32) + bfc1_ref[...]
        # nn.Dropout(0.5) is identity in eval mode (no mask, no scaling).
        ip1 = jnp.dot(h.astype(jnp.bfloat16), wip1_ref[...],
                      preferred_element_type=jnp.float32) + bip1_ref[...]
        x_out = jnp.dot(ip1.astype(jnp.bfloat16), wlast_ref[...],
                        preferred_element_type=jnp.float32) + blast_ref[...]
        ip1_ref[0] = ip1
        xout_ref[0] = x_out


# ---------------------------------------------------------------------------
# Wrapper: layout prep + one pallas_call.
# ---------------------------------------------------------------------------
def efficientnet_centerloss_forward(params, x_nchw, output_size, *, oh_tile=None):
    """Returns (x, ip1) like the PyTorch module (eval mode)."""
    B, Cin, H, W = x_nchw.shape
    assert H % 2 == 0 and W % 2 == 0, "stride-2 SAME stem expects even H, W"
    OH, OW = H // 2, W // 2
    Cp = _round_up(max(Cin, 1), 4)    # channel pad (RGB -> 4)
    K4 = 4 * Cp                       # one 2x2 space-to-depth cell
    K64 = 4 * K4                      # fused 4x4 window (covers all 3x3 taps)
    NPAD = _round_up(max(output_size, 1), LANE)

    if oh_tile is None:
        # One spatial step per image unless the window block exceeds ~8 MiB bf16.
        max_rows = max(8, (8 << 20) // max(OW * K64 * 2, 1))
        oh_tile = OH if OH <= max_rows else max(8, (max_rows // 8) * 8)
    oh_tile = int(min(oh_tile, OH))
    n_s = -(-OH // oh_tile)
    OHp = n_s * oh_tile

    # Layout prep (one fused XLA pass): NCHW -> NHWC bf16, TF-SAME pad (+1 extra
    # zero row/col so the 3x3/s2 conv is a dense 4x4-window matmul), channel pad,
    # space-to-depth, then 2x2 neighbour concat -> lane-dense K=64 operand.
    x = jnp.transpose(x_nchw.astype(jnp.bfloat16), (0, 2, 3, 1))
    x = jnp.pad(x, ((0, 0), (0, 2 * (OH + 1) - H), (0, 2 * (OW + 1) - W),
                    (0, Cp - Cin)))
    s2d = x.reshape(B, OH + 1, 2, OW + 1, 2, Cp).transpose(0, 1, 3, 2, 4, 5)
    s2d = s2d.reshape(B, OH + 1, OW + 1, K4)
    win = jnp.concatenate(
        [s2d[:, di:di + OH, dj:dj + OW, :] for di in range(2) for dj in range(2)],
        axis=-1)                                                  # (B, OH, OW, 64)
    if OHp != OH:
        win = jnp.pad(win, ((0, 0), (0, OHp - OH), (0, 0), (0, 0)))

    # Fused conv weight, packed in the same (DI, DJ, dr, dc, c) order as `win`
    # (unused 4th-row/col taps and padded channels are zero).
    w_stem = params["w_stem"]                                     # (3, 3, Cin, 32)
    wp = jnp.zeros((4, 4, Cp, STEM_C), jnp.float32).at[:3, :3, :Cin, :].set(w_stem)
    w64 = wp.reshape(2, 2, 2, 2, Cp, STEM_C).transpose(0, 2, 1, 3, 4, 5)
    w64 = w64.reshape(K64, STEM_C).astype(jnp.bfloat16)

    # Lane-pad the tiny head matrices (IPD=2, output_size) to 128 lanes.
    w_ip1 = jnp.zeros((FC1, LANE), jnp.float32).at[:, :IPD].set(params["w_ip1"])
    b_ip1 = jnp.zeros((1, LANE), jnp.float32).at[:, :IPD].set(params["b_ip1"])
    w_last = jnp.zeros((LANE, NPAD), jnp.float32).at[:IPD, :output_size].set(params["w_last"])
    b_last = jnp.zeros((1, NPAD), jnp.float32).at[:, :output_size].set(params["b_last"])

    kernel = functools.partial(_fused_fwd_kernel, oh_tile=oh_tile, oh=OH, ow=OW)
    rep2 = lambda b, s: (0, 0)

    x_block_bytes = oh_tile * OW * K64 * 2
    vmem_limit = int(min(64 << 20, max(32 << 20, 4 * x_block_bytes + (4 << 20))))

    x_out_p, ip1_p = pl.pallas_call(
        kernel,
        out_shape=(
            jax.ShapeDtypeStruct((B, 1, NPAD), jnp.float32),
            jax.ShapeDtypeStruct((B, 1, LANE), jnp.float32),
        ),
        grid_spec=pltpu.PrefetchScalarGridSpec(
            num_scalar_prefetch=0,
            grid=(B, n_s),
            in_specs=[
                pl.BlockSpec((1, oh_tile, OW, K64), lambda b, s: (b, s, 0, 0)),
                pl.BlockSpec((K64, STEM_C), rep2),
                pl.BlockSpec((1, STEM_C), rep2),
                pl.BlockSpec((STEM_C, FEAT), rep2),
                pl.BlockSpec((1, FEAT), rep2),
                pl.BlockSpec((FEAT, FC1), rep2),
                pl.BlockSpec((1, FC1), rep2),
                pl.BlockSpec((FC1, LANE), rep2),
                pl.BlockSpec((1, LANE), rep2),
                pl.BlockSpec((LANE, NPAD), rep2),
                pl.BlockSpec((1, NPAD), rep2),
            ],
            out_specs=(
                pl.BlockSpec((1, 1, NPAD), lambda b, s: (b, 0, 0)),
                pl.BlockSpec((1, 1, LANE), lambda b, s: (b, 0, 0)),
            ),
            scratch_shapes=[pltpu.VMEM((1, STEM_C), jnp.float32)],
        ),
        compiler_params=pltpu.CompilerParams(
            dimension_semantics=("parallel", "arbitrary"),
            vmem_limit_bytes=vmem_limit,
        ),
    )(win, w64, params["b_stem"],
      params["w_base"].astype(jnp.bfloat16), params["b_base"],
      params["w_fc1"].astype(jnp.bfloat16), params["b_fc1"],
      w_ip1.astype(jnp.bfloat16), b_ip1,
      w_last.astype(jnp.bfloat16), b_last)

    return x_out_p[:, 0, :output_size], ip1_p[:, 0, :IPD]


# ---------------------------------------------------------------------------
# Params + pure-JAX reference (same bf16 quantization points as the kernel).
# ---------------------------------------------------------------------------
def init_params(key, output_size, in_c=3):
    ks = jax.random.split(key, 10)
    s = 0.05
    return {
        "w_stem": jax.random.normal(ks[0], (3, 3, in_c, STEM_C), jnp.float32) * s,
        "b_stem": jax.random.normal(ks[1], (1, STEM_C), jnp.float32) * s,
        "w_base": jax.random.normal(ks[2], (STEM_C, FEAT), jnp.float32) * s,
        "b_base": jax.random.normal(ks[3], (1, FEAT), jnp.float32) * s,
        "w_fc1":  jax.random.normal(ks[4], (FEAT, FC1), jnp.float32) * s,
        "b_fc1":  jax.random.normal(ks[5], (1, FC1), jnp.float32) * s,
        "w_ip1":  jax.random.normal(ks[6], (FC1, IPD), jnp.float32) * s,
        "b_ip1":  jax.random.normal(ks[7], (1, IPD), jnp.float32) * s,
        "w_last": jax.random.normal(ks[8], (IPD, output_size), jnp.float32) * s,
        "b_last": jax.random.normal(ks[9], (1, output_size), jnp.float32) * s,
    }


def reference_forward(params, x_nchw, output_size):
    x = jnp.transpose(x_nchw, (0, 2, 3, 1)).astype(jnp.float32)
    B, H, W, C = x.shape
    OH, OW = H // 2, W // 2
    xp = jnp.pad(x, ((0, 0), (0, 1), (0, 1), (0, 0)))            # TF-SAME, k=3, s=2
    cols = [xp[:, i:i + 2 * OH:2, j:j + 2 * OW:2, :] for i in range(3) for j in range(3)]
    patches = jnp.concatenate(cols, axis=-1).reshape(B, OH * OW, 9 * C)
    w = params["w_stem"].reshape(9 * C, STEM_C)
    conv = jnp.dot(patches.astype(jnp.bfloat16), w.astype(jnp.bfloat16),
                   preferred_element_type=jnp.float32) + params["b_stem"]
    act = conv * jax.nn.sigmoid(conv)
    pooled = act.mean(axis=1)
    feats = jnp.dot(pooled.astype(jnp.bfloat16), params["w_base"].astype(jnp.bfloat16),
                    preferred_element_type=jnp.float32) + params["b_base"]
    h = jnp.dot(feats.astype(jnp.bfloat16), params["w_fc1"].astype(jnp.bfloat16),
                preferred_element_type=jnp.float32) + params["b_fc1"]
    ip1 = jnp.dot(h.astype(jnp.bfloat16), params["w_ip1"].astype(jnp.bfloat16),
                  preferred_element_type=jnp.float32) + params["b_ip1"]
    x_out = jnp.dot(ip1.astype(jnp.bfloat16), params["w_last"].astype(jnp.bfloat16),
                    preferred_element_type=jnp.float32) + params["b_last"]
    return x_out, ip1


if __name__ == "__main__":
    key = jax.random.PRNGKey(0)
    k_param, k_x = jax.random.split(key)

    output_size = 10
    x = jax.random.normal(k_x, (2, 3, 16, 16), jnp.float32)      # NCHW, like PyTorch
    params = init_params(k_param, output_size)

    x_exp, ip1_exp = reference_forward(params, x, output_size)

    # Default: one spatial grid step per image (grid = (B, 1)) -- the fast path.
    fwd1 = jax.jit(functools.partial(
        efficientnet_centerloss_forward, output_size=output_size))
    x1, ip1_1 = fwd1(params, x)
    jax.block_until_ready((x1, ip1_1))

    # oh_tile=4 -> 2 spatial steps: exercises the pooled-accumulator reduction.
    fwd2 = jax.jit(functools.partial(
        efficientnet_centerloss_forward, output_size=output_size, oh_tile=4))
    x2, ip1_2 = fwd2(params, x)
    jax.block_until_ready((x2, ip1_2))

    # oh_tile=3 -> 3 steps with a padded tail row: exercises the gated tail mask.
    fwd3 = jax.jit(functools.partial(
        efficientnet_centerloss_forward, output_size=output_size, oh_tile=3))
    x3, ip1_3 = fwd3(params, x)
    jax.block_until_ready((x3, ip1_3))

    assert x1.shape == (2, output_size) and ip1_1.shape == (2, IPD)

    err = max(
        float(jnp.max(jnp.abs(x1 - x_exp))), float(jnp.max(jnp.abs(ip1_1 - ip1_exp))),
        float(jnp.max(jnp.abs(x2 - x_exp))), float(jnp.max(jnp.abs(ip1_2 - ip1_exp))),
        float(jnp.max(jnp.abs(x3 - x_exp))), float(jnp.max(jnp.abs(ip1_3 - ip1_exp))),
    )
    assert err < 1e-3, f"kernel/reference mismatch: max abs err {err}"
    print("KERNEL_OK")
</pallas_src>

<mosaic_0001>
module attributes {stable_mosaic.version = 11 : i64} {
  func.func @_fused_fwd_kernel(%arg0: i32, %arg1: i32, %arg2: memref<1x8x8x64xbf16, #tpu.memory_space<vmem>>, %arg3: memref<64x32xbf16, #tpu.memory_space<vmem>>, %arg4: memref<1x32xf32, #tpu.memory_space<vmem>>, %arg5: memref<32x512xbf16, #tpu.memory_space<vmem>>, %arg6: memref<1x512xf32, #tpu.memory_space<vmem>>, %arg7: memref<512x64xbf16, #tpu.memory_space<vmem>>, %arg8: memref<1x64xf32, #tpu.memory_space<vmem>>, %arg9: memref<64x128xbf16, #tpu.memory_space<vmem>>, %arg10: memref<1x128xf32, #tpu.memory_space<vmem>>, %arg11: memref<128x128xbf16, #tpu.memory_space<vmem>>, %arg12: memref<1x128xf32, #tpu.memory_space<vmem>>, %arg13: memref<1x1x128xf32, #tpu.memory_space<vmem>>, %arg14: memref<1x1x128xf32, #tpu.memory_space<vmem>>, %arg15: memref<1x32xf32, #tpu.memory_space<vmem>>) attributes {dimension_semantics = [#tpu.dimension_semantics<parallel>, #tpu.dimension_semantics<arbitrary>], iteration_bounds = array<i64: 2, 1>, scalar_prefetch = 0 : i64, scratch_operands = 1 : i64, tpu.core_type = #tpu.core_type<tc>, window_params = [{transform_indices = @transform_0, window_bounds = array<i64: 1, 8, 8, 64>}, {pipeline_mode = #tpu.pipeline_mode<synchronous>, transform_indices = @transform_1, window_bounds = array<i64: 64, 32>}, {pipeline_mode = #tpu.pipeline_mode<synchronous>, transform_indices = @transform_2, window_bounds = array<i64: 1, 32>}, {pipeline_mode = #tpu.pipeline_mode<synchronous>, transform_indices = @transform_3, window_bounds = array<i64: 32, 512>}, {pipeline_mode = #tpu.pipeline_mode<synchronous>, transform_indices = @transform_4, window_bounds = array<i64: 1, 512>}, {pipeline_mode = #tpu.pipeline_mode<synchronous>, transform_indices = @transform_5, window_bounds = array<i64: 512, 64>}, {pipeline_mode = #tpu.pipeline_mode<synchronous>, transform_indices = @transform_6, window_bounds = array<i64: 1, 64>}, {pipeline_mode = #tpu.pipeline_mode<synchronous>, transform_indices = @transform_7, window_bounds = array<i64: 64, 128>}, {pipeline_mode = #tpu.pipeline_mode<synchronous>, transform_indices = @transform_8, window_bounds = array<i64: 1, 128>}, {pipeline_mode = #tpu.pipeline_mode<synchronous>, transform_indices = @transform_9, window_bounds = array<i64: 128, 128>}, {pipeline_mode = #tpu.pipeline_mode<synchronous>, transform_indices = @transform_10, window_bounds = array<i64: 1, 128>}, {transform_indices = @transform_11, window_bounds = array<i64: 1, 1, 128>}, {transform_indices = @transform_12, window_bounds = array<i64: 1, 1, 128>}]} {
    %c0_i32 = arith.constant 0 : i32
    %0 = arith.cmpi eq, %arg1, %c0_i32 : i32
    %1 = arith.extui %0 : i1 to i32
    %c0_i32_0 = arith.constant 0 : i32
    %2 = arith.cmpi ne, %1, %c0_i32_0 : i32
    scf.if %2 {
      %cst_16 = arith.constant 0.000000e+00 : f32
      %25 = vector.broadcast %cst_16 : f32 to vector<1x32xf32>
      %c0_17 = arith.constant 0 : index
      %c0_18 = arith.constant 0 : index
      %26 = vector.load %arg15[%c0_17, %c0_18] : memref<1x32xf32, #tpu.memory_space<vmem>>, vector<1x32xf32>
      tpu.vector_store %arg15[%c0_17, %c0_18], %25 {strides = array<i32>} : memref<1x32xf32, #tpu.memory_space<vmem>>, vector<1x32xf32>,
    } else {
    }
    %c0 = arith.constant 0 : index
    %c0_1 = arith.constant 0 : index
    %c0_2 = arith.constant 0 : index
    %c0_3 = arith.constant 0 : index
    %3 = vector.load %arg2[%c0, %c0_1, %c0_2, %c0_3] : memref<1x8x8x64xbf16, #tpu.memory_space<vmem>>, vector<1x8x8x64xbf16>
    %4 = vector.shape_cast %3 : vector<1x8x8x64xbf16> to vector<8x8x64xbf16>
    %5 = vector.shape_cast %4 : vector<8x8x64xbf16> to vector<64x64xbf16>
    %c0_4 = arith.constant 0 : index
    %c0_5 = arith.constant 0 : index
    %6 = vector.load %arg3[%c0_4, %c0_5] : memref<64x32xbf16, #tpu.memory_space<vmem>>, vector<64x32xbf16>
    %cst = arith.constant dense<0.000000e+00> : vector<64x32xf32>
    %7 = tpu.matmul %5, %6, %cst {dimension_numbers = #tpu.dot_dimension_numbers<[1], [0], [0], [1], [0, 0, 1, 1], [], []>} : vector<64x64xbf16>, vector<64x32xbf16>, vector<64x32xf32> -> vector<64x32xf32>
    %c0_6 = arith.constant 0 : index
    %c0_7 = arith.constant 0 : index
    %8 = vector.load %arg4[%c0_6, %c0_7] : memref<1x32xf32, #tpu.memory_space<vmem>>, vector<1x32xf32>
    %9 = vector.broadcast %8 : vector<1x32xf32> to vector<64x32xf32>
    %10 = arith.addf %7, %9 : vector<64x32xf32>
    %11 = arith.negf %10 : vector<64x32xf32>
    %12 = math.exp %11 : vector<64x32xf32>
    %cst_8 = arith.constant 1.000000e+00 : f32
    %13 = vector.broadcast %cst_8 : f32 to vector<64x32xf32>
    %14 = arith.addf %13, %12 : vector<64x32xf32>
    %15 = arith.divf %13, %14 : vector<64x32xf32>
    %16 = arith.mulf %10, %15 : vector<64x32xf32>
    %c0_9 = arith.constant 0 : index
    %c0_10 = arith.constant 0 : index
    %17 = vector.load %arg15[%c0_9, %c0_10] : memref<1x32xf32, #tpu.memory_space<vmem>>, vector<1x32xf32>
    %cst_11 = arith.constant dense<0.000000e+00> : vector<32xf32>
    %18 = vector.multi_reduction <add>, %16, %cst_11 [0] : vector<64x32xf32> to vector<32xf32>
    %19 = vector.shape_cast %18 : vector<32xf32> to vector<1x32xf32>
    %20 = arith.addf %17, %19 : vector<1x32xf32>
    %c0_12 = arith.constant 0 : index
    %c0_13 = arith.constant 0 : index
    %21 = vector.load %arg15[%c0_12, %c0_13] : memref<1x32xf32, #tpu.memory_space<vmem>>, vector<1x32xf32>
    tpu.vector_store %arg15[%c0_12, %c0_13], %20 {strides = array<i32>} : memref<1x32xf32, #tpu.memory_space<vmem>>, vector<1x32xf32>,
    %c0_i32_14 = arith.constant 0 : i32
    %22 = arith.cmpi eq, %arg1, %c0_i32_14 : i32
    %23 = arith.extui %22 : i1 to i32
    %c0_i32_15 = arith.constant 0 : i32
    %24 = arith.cmpi ne, %23, %c0_i32_15 : i32
    scf.if %24 {
      %c0_16 = arith.constant 0 : index
      %c0_17 = arith.constant 0 : index
      %25 = vector.load %arg15[%c0_16, %c0_17] : memref<1x32xf32, #tpu.memory_space<vmem>>, vector<1x32xf32>
      %cst_18 = arith.constant 1.562500e-02 : f32
      %26 = vector.broadcast %cst_18 : f32 to vector<1x32xf32>
      %27 = arith.mulf %25, %26 : vector<1x32xf32>
      %28 = arith.truncf %27 : vector<1x32xf32> to vector<1x32xbf16>
      %c0_19 = arith.constant 0 : index
      %c0_20 = arith.constant 0 : index
      %29 = vector.load %arg5[%c0_19, %c0_20] : memref<32x512xbf16, #tpu.memory_space<vmem>>, vector<32x512xbf16>
      %cst_21 = arith.constant dense<0.000000e+00> : vector<1x512xf32>
      %30 = tpu.matmul %28, %29, %cst_21 {dimension_numbers = #tpu.dot_dimension_numbers<[1], [0], [0], [1], [0, 0, 1, 1], [], []>} : vector<1x32xbf16>, vector<32x512xbf16>, vector<1x512xf32> -> vector<1x512xf32>
      %c0_22 = arith.constant 0 : index
      %c0_23 = arith.constant 0 : index
      %31 = vector.load %arg6[%c0_22, %c0_23] : memref<1x512xf32, #tpu.memory_space<vmem>>, vector<1x512xf32>
      %32 = arith.addf %30, %31 : vector<1x512xf32>
      %33 = arith.truncf %32 : vector<1x512xf32> to vector<1x512xbf16>
      %c0_24 = arith.constant 0 : index
      %c0_25 = arith.constant 0 : index
      %34 = vector.load %arg7[%c0_24, %c0_25] : memref<512x64xbf16, #tpu.memory_space<vmem>>, vector<512x64xbf16>
      %cst_26 = arith.constant dense<0.000000e+00> : vector<1x64xf32>
      %35 = tpu.matmul %33, %34, %cst_26 {dimension_numbers = #tpu.dot_dimension_numbers<[1], [0], [0], [1], [0, 0, 1, 1], [], []>} : vector<1x512xbf16>, vector<512x64xbf16>, vector<1x64xf32> -> vector<1x64xf32>
      %c0_27 = arith.constant 0 : index
      %c0_28 = arith.constant 0 : index
      %36 = vector.load %arg8[%c0_27, %c0_28] : memref<1x64xf32, #tpu.memory_space<vmem>>, vector<1x64xf32>
      %37 = arith.addf %35, %36 : vector<1x64xf32>
      %38 = arith.truncf %37 : vector<1x64xf32> to vector<1x64xbf16>
      %c0_29 = arith.constant 0 : index
      %c0_30 = arith.constant 0 : index
      %39 = vector.load %arg9[%c0_29, %c0_30] : memref<64x128xbf16, #tpu.memory_space<vmem>>, vector<64x128xbf16>
      %cst_31 = arith.constant dense<0.000000e+00> : vector<1x128xf32>
      %40 = tpu.matmul %38, %39, %cst_31 {dimension_numbers = #tpu.dot_dimension_numbers<[1], [0], [0], [1], [0, 0, 1, 1], [], []>} : vector<1x64xbf16>, vector<64x128xbf16>, vector<1x128xf32> -> vector<1x128xf32>
      %c0_32 = arith.constant 0 : index
      %c0_33 = arith.constant 0 : index
      %41 = vector.load %arg10[%c0_32, %c0_33] : memref<1x128xf32, #tpu.memory_space<vmem>>, vector<1x128xf32>
      %42 = arith.addf %40, %41 : vector<1x128xf32>
      %43 = arith.truncf %42 : vector<1x128xf32> to vector<1x128xbf16>
      %c0_34 = arith.constant 0 : index
      %c0_35 = arith.constant 0 : index
      %44 = vector.load %arg11[%c0_34, %c0_35] : memref<128x128xbf16, #tpu.memory_space<vmem>>, vector<128x128xbf16>
      %cst_36 = arith.constant dense<0.000000e+00> : vector<1x128xf32>
      %45 = tpu.matmul %43, %44, %cst_36 {dimension_numbers = #tpu.dot_dimension_numbers<[1], [0], [0], [1], [0, 0, 1, 1], [], []>} : vector<1x128xbf16>, vector<128x128xbf16>, vector<1x128xf32> -> vector<1x128xf32>
      %c0_37 = arith.constant 0 : index
      %c0_38 = arith.constant 0 : index
      %46 = vector.load %arg12[%c0_37, %c0_38] : memref<1x128xf32, #tpu.memory_space<vmem>>, vector<1x128xf32>
      %47 = arith.addf %45, %46 : vector<1x128xf32>
      %c0_39 = arith.constant 0 : index
      %c0_40 = arith.constant 0 : index
      %c0_41 = arith.constant 0 : index
      %48 = vector.load %arg14[%c0_39, %c0_40, %c0_41] : memref<1x1x128xf32, #tpu.memory_space<vmem>>, vector<1x1x128xf32>
      %49 = vector.shape_cast %48 : vector<1x1x128xf32> to vector<1x128xf32>
      %50 = vector.shape_cast %42 : vector<1x128xf32> to vector<1x1x128xf32>
      tpu.vector_store %arg14[%c0_39, %c0_40, %c0_41], %50 {strides = array<i32>} : memref<1x1x128xf32, #tpu.memory_space<vmem>>, vector<1x1x128xf32>,
      %c0_42 = arith.constant 0 : index
      %c0_43 = arith.constant 0 : index
      %c0_44 = arith.constant 0 : index
      %51 = vector.load %arg13[%c0_42, %c0_43, %c0_44] : memref<1x1x128xf32, #tpu.memory_space<vmem>>, vector<1x1x128xf32>
      %52 = vector.shape_cast %51 : vector<1x1x128xf32> to vector<1x128xf32>
      %53 = vector.shape_cast %47 : vector<1x128xf32> to vector<1x1x128xf32>
      tpu.vector_store %arg13[%c0_42, %c0_43, %c0_44], %53 {strides = array<i32>} : memref<1x1x128xf32, #tpu.memory_space<vmem>>, vector<1x1x128xf32>,
    } else {
    }
    return
  }
  func.func @transform_0(%arg0: i32, %arg1: i32) -> (i32, i32, i32, i32) {
    %c0_i32 = arith.constant 0 : i32
    %c0_i32_0 = arith.constant 0 : i32
    %c0_i32_1 = arith.constant 0 : i32
    return %arg0, %arg1, %c0_i32, %c0_i32_0 : i32, i32, i32, i32
  }
  func.func @transform_1(%arg0: i32, %arg1: i32) -> (i32, i32) {
    %c0_i32 = arith.constant 0 : i32
    %c0_i32_0 = arith.constant 0 : i32
    %c0_i32_1 = arith.constant 0 : i32
    return %c0_i32, %c0_i32_0 : i32, i32
  }
  func.func @transform_2(%arg0: i32, %arg1: i32) -> (i32, i32) {
    %c0_i32 = arith.constant 0 : i32
    %c0_i32_0 = arith.constant 0 : i32
    %c0_i32_1 = arith.constant 0 : i32
    return %c0_i32, %c0_i32_0 : i32, i32
  }
  func.func @transform_3(%arg0: i32, %arg1: i32) -> (i32, i32) {
    %c0_i32 = arith.constant 0 : i32
    %c0_i32_0 = arith.constant 0 : i32
    %c0_i32_1 = arith.constant 0 : i32
    return %c0_i32, %c0_i32_0 : i32, i32
  }
  func.func @transform_4(%arg0: i32, %arg1: i32) -> (i32, i32) {
    %c0_i32 = arith.constant 0 : i32
    %c0_i32_0 = arith.constant 0 : i32
    %c0_i32_1 = arith.constant 0 : i32
    return %c0_i32, %c0_i32_0 : i32, i32
  }
  func.func @transform_5(%arg0: i32, %arg1: i32) -> (i32, i32) {
    %c0_i32 = arith.constant 0 : i32
    %c0_i32_0 = arith.constant 0 : i32
    %c0_i32_1 = arith.constant 0 : i32
    return %c0_i32, %c0_i32_0 : i32, i32
  }
  func.func @transform_6(%arg0: i32, %arg1: i32) -> (i32, i32) {
    %c0_i32 = arith.constant 0 : i32
    %c0_i32_0 = arith.constant 0 : i32
    %c0_i32_1 = arith.constant 0 : i32
    return %c0_i32, %c0_i32_0 : i32, i32
  }
  func.func @transform_7(%arg0: i32, %arg1: i32) -> (i32, i32) {
    %c0_i32 = arith.constant 0 : i32
    %c0_i32_0 = arith.constant 0 : i32
    %c0_i32_1 = arith.constant 0 : i32
    return %c0_i32, %c0_i32_0 : i32, i32
  }
  func.func @transform_8(%arg0: i32, %arg1: i32) -> (i32, i32) {
    %c0_i32 = arith.constant 0 : i32
    %c0_i32_0 = arith.constant 0 : i32
    %c0_i32_1 = arith.constant 0 : i32
    return %c0_i32, %c0_i32_0 : i32, i32
  }
  func.func @transform_9(%arg0: i32, %arg1: i32) -> (i32, i32) {
    %c0_i32 = arith.constant 0 : i32
    %c0_i32_0 = arith.constant 0 : i32
    %c0_i32_1 = arith.constant 0 : i32
    return %c0_i32, %c0_i32_0 : i32, i32
  }
  func.func @transform_10(%arg0: i32, %arg1: i32) -> (i32, i32) {
    %c0_i32 = arith.constant 0 : i32
    %c0_i32_0 = arith.constant 0 : i32
    %c0_i32_1 = arith.constant 0 : i32
    return %c0_i32, %c0_i32_0 : i32, i32
  }
  func.func @transform_11(%arg0: i32, %arg1: i32) -> (i32, i32, i32) {
    %c0_i32 = arith.constant 0 : i32
    %c0_i32_0 = arith.constant 0 : i32
    %c0_i32_1 = arith.constant 0 : i32
    return %arg0, %c0_i32, %c0_i32_0 : i32, i32, i32
  }
  func.func @transform_12(%arg0: i32, %arg1: i32) -> (i32, i32, i32) {
    %c0_i32 = arith.constant 0 : i32
    %c0_i32_0 = arith.constant 0 : i32
    %c0_i32_1 = arith.constant 0 : i32
    return %arg0, %c0_i32, %c0_i32_0 : i32, i32, i32
  }
}

</mosaic_0001>

<llo_original>
// kernel: efficientnet_centerloss_forward.1
$region0: #{efficientnet_centerloss_forward.1}
  #allocation0 [shape = 'u32[]', space=smem, size = 0x4, offset = 0x4, fixed_abs, tag = 'smem constant byte address 0x4 - core index']
  #allocation1 [shape = 'u32[144,128]{1,0:T(1,128)}', space=vmem, size = 0x12000, scoped, tag = 'internal scratch']
  #allocation2 [shape = 'f32[1,32]{1,0:T(1,128)}', space=vmem, size = 0x200, scoped, tag = 'scratch operand']
  %s0 = inlined_call_operand.vmem [shape: bf16[2,8,8,64], index: 0, kind: input, shape index: {}]
  %s1 = inlined_call_operand.vmem [shape: bf16[64,32], index: 1, kind: input, shape index: {}]
  %s2 = inlined_call_operand.vmem [shape: f32[1,32], index: 2, kind: input, shape index: {}]
  %s3 = inlined_call_operand.vmem [shape: bf16[32,512], index: 3, kind: input, shape index: {}]
  %s4 = inlined_call_operand.vmem [shape: f32[1,512], index: 4, kind: input, shape index: {}]
  %s5 = inlined_call_operand.vmem [shape: bf16[512,64], index: 5, kind: input, shape index: {}]
  %s6 = inlined_call_operand.vmem [shape: f32[1,64], index: 6, kind: input, shape index: {}]
  %s7 = inlined_call_operand.vmem [shape: bf16[64,128], index: 7, kind: input, shape index: {}]
  %s8 = inlined_call_operand.vmem [shape: f32[1,128], index: 8, kind: input, shape index: {}]
  %s9 = inlined_call_operand.vmem [shape: bf16[128,128], index: 9, kind: input, shape index: {}]
  %s10 = inlined_call_operand.vmem [shape: f32[1,128], index: 10, kind: input, shape index: {}]
  %s11 = inlined_call_operand.hbm [shape: f32[2,1,128], index: 11, kind: output, shape index: {0}]
  %s12 = inlined_call_operand.hbm [shape: f32[2,1,128], index: 12, kind: output, shape index: {1}]
  %13 = xla_tuple %s11, %s12
  %s14 = sld [smem:[#allocation0]]
  $region93: #{efficientnet_centerloss_forward.1} parent=0
    _
  %s16 = ssub.s32 1, %s14
  %s17 = scalar_select 0, %s16, %s14
  $region1: #{efficientnet_centerloss_forward.1} parent=0
    #allocation3 [shape = 'u8[1024]{0}', space=vmem, size = 0x400, scoped, tag = 'output window, operand 0']
    #allocation4 [shape = 's32[2]{0}', space=sflag, size = 0x8, scoped, tag = 'scoped memory for efficientnet_centerloss_forward.1']
    #allocation5 [shape = 'u8[1024]{0}', space=vmem, size = 0x400, scoped, tag = 'output window, operand 1']
    #allocation6 [shape = 's32[2]{0}', space=sflag, size = 0x8, scoped, tag = 'scoped memory for efficientnet_centerloss_forward.1']
    %18 = vsyncpa [#allocation4], 0
    %s19 = scalar_lea.sflag [#allocation4], 1
    %20 = vsyncpa %s19, 0
    %21 = vsyncpa [#allocation6], 0
    %s22 = scalar_lea.sflag [#allocation6], 1
    %23 = vsyncpa %s22, 0
    loop: start=0, step=1, limit=4
    $region2: #{efficientnet_centerloss_forward.1} parent=1 // loop_pre_header
      _
    $region3: #{efficientnet_centerloss_forward.1} parent=1 // loop_header
      %s25 = sphi 0, %s29
      %p26 = scmp.ge.s32.totalorder %s25, 4
      %s32 = sphi 0, %s44
      %s33 = sphi 0, %s40
      %s34 = sphi 0, %s32
      %s35 = sphi 0, %s33
      %s36 = sphi 0, %s34
      %s37 = sphi 0, %s35
      %s49 = sphi 0, %s51
      %s52 = sphi 0, %s49
      %s53 = sphi 0, %s52
      %s69 = sphi 0, %s53
      %s73 = sphi 0, %s73
      %s75 = sphi 0, %s73
      %s76 = sphi 0, %s75
      %s90 = sphi 0, %s76
      %s94 = sphi 0, %s94
      %s96 = sphi 0, %s94
      %s97 = sphi 0, %s96
      %s111 = sphi 0, %s97
      %s115 = sphi 0, %s115
      %s117 = sphi 0, %s115
      %s118 = sphi 0, %s117
      %s132 = sphi 0, %s118
      %s136 = sphi 0, %s136
      %s138 = sphi 0, %s136
      %s139 = sphi 0, %s138
      %s153 = sphi 0, %s139
      %s157 = sphi 0, %s157
      %s159 = sphi 0, %s157
      %s160 = sphi 0, %s159
      %s174 = sphi 0, %s160
      %s178 = sphi 0, %s178
      %s180 = sphi 0, %s178
      %s181 = sphi 0, %s180
      %s195 = sphi 0, %s181
      %s199 = sphi 0, %s199
      %s201 = sphi 0, %s199
      %s202 = sphi 0, %s201
      %s216 = sphi 0, %s202
      %s220 = sphi 0, %s220
      %s222 = sphi 0, %s220
      %s223 = sphi 0, %s222
      %s237 = sphi 0, %s223
      %s241 = sphi 0, %s241
      %s243 = sphi 0, %s241
      %s244 = sphi 0, %s243
      %s258 = sphi 0, %s244
      %s262 = sphi 0, %s262
      %s264 = sphi 0, %s262
      %s265 = sphi 0, %s264
      %s279 = sphi 0, %s265
      %s285 = sphi 0, %s287
      %s288 = sphi 0, %s285
      %s289 = sphi 0, %s288
      %s305 = sphi 0, %s289
      %s311 = sphi 0, %s313
      %s314 = sphi 0, %s311
      %s315 = sphi 0, %s314
      %s331 = sphi 0, %s315
    $region4: #{efficientnet_centerloss_forward.1} parent=1 // loop_header_branch
      %28 = sbr.rel (%p26) target = $region8
    $region5: #{efficientnet_centerloss_forward.1} parent=1 // loop_body
      %s30 = ssub.s32 %s25, 1
      %s31 = ssub.s32 %s25, 2
      %s38 = sadd.s32 1, %s33
      %p39 = scmp.ge.s32.totalorder %s38, 1
      %s40 = scalar_select %p39, 0, %s38
      %s41 = sadd.s32 1, %s32
      %s42 = scalar_select %p39, %s41, %s32
      %p43 = scmp.ge.s32.totalorder %s42, 2
      %s44 = scalar_select %p43, 0, %s42
      %s45 = ssub.s32 %s32, %s44
      %s46 = ssub.s32 %s33, %s40
      %s47 = sor.u32 %s45, %s46
      %p48 = scmp.eq.s32.totalorder %s47, 0
      %s50 = sadd.s32 %s49, 1
      %s51 = scalar_select %p48, %s49, %s50
      %p54 = pneg %p48
      %p55 = scmp.eq.s32.totalorder %s25, 1
      %p56 = por %p54, %p55
      %p57 = scmp.ne.s32.totalorder %s49, %s52
      %p58 = scmp.eq.s32.totalorder %s25, 0
      %p59 = por %p57, %p58
      %p60 = scmp.ne.s32.totalorder %s49, %s52
      %p61 = scmp.eq.s32.totalorder %s30, 1
      %p62 = por %p60, %p61
      %p63 = scmp.ne.s32.totalorder %s52, %s53
      %p64 = scmp.eq.s32.totalorder %s30, 0
      %p65 = por %p63, %p64
      %p66 = scmp.ne.s32.totalorder %s52, %s53
      %p67 = scmp.eq.s32.totalorder %s31, 1
      %p68 = por %p66, %p67
      %p70 = scmp.ne.s32.totalorder %s53, %s69
      %p71 = scmp.eq.s32.totalorder %s31, 0
      %p72 = por %p70, %p71
      %s74 = sadd.s32 %s73, 1
      %p77 = scmp.eq.s32.totalorder %s25, 1
      %p78 = scmp.ne.s32.totalorder %s73, %s75
      %p79 = scmp.eq.s32.totalorder %s25, 0
      %p80 = por %p78, %p79
      %p81 = scmp.ne.s32.totalorder %s73, %s75
      %p82 = scmp.eq.s32.totalorder %s30, 1
      %p83 = por %p81, %p82
      %p84 = scmp.ne.s32.totalorder %s75, %s76
      %p85 = scmp.eq.s32.totalorder %s30, 0
      %p86 = por %p84, %p85
      %p87 = scmp.ne.s32.totalorder %s75, %s76
      %p88 = scmp.eq.s32.totalorder %s31, 1
      %p89 = por %p87, %p88
      %p91 = scmp.ne.s32.totalorder %s76, %s90
      %p92 = scmp.eq.s32.totalorder %s31, 0
      %p93 = por %p91, %p92
      %s95 = sadd.s32 %s94, 1
      %p98 = scmp.eq.s32.totalorder %s25, 1
      %p99 = scmp.ne.s32.totalorder %s94, %s96
      %p100 = scmp.eq.s32.totalorder %s25, 0
      %p101 = por %p99, %p100
      %p102 = scmp.ne.s32.totalorder %s94, %s96
      %p103 = scmp.eq.s32.totalorder %s30, 1
      %p104 = por %p102, %p103
      %p105 = scmp.ne.s32.totalorder %s96, %s97
      %p106 = scmp.eq.s32.totalorder %s30, 0
      %p107 = por %p105, %p106
      %p108 = scmp.ne.s32.totalorder %s96, %s97
      %p109 = scmp.eq.s32.totalorder %s31, 1
      %p110 = por %p108, %p109
      %p112 = scmp.ne.s32.totalorder %s97, %s111
      %p113 = scmp.eq.s32.totalorder %s31, 0
      %p114 = por %p112, %p113
      %s116 = sadd.s32 %s115, 1
      %p119 = scmp.eq.s32.totalorder %s25, 1
      %p120 = scmp.ne.s32.totalorder %s115, %s117
      %p121 = scmp.eq.s32.totalorder %s25, 0
      %p122 = por %p120, %p121
      %p123 = scmp.ne.s32.totalorder %s115, %s117
      %p124 = scmp.eq.s32.totalorder %s30, 1
      %p125 = por %p123, %p124
      %p126 = scmp.ne.s32.totalorder %s117, %s118
      %p127 = scmp.eq.s32.totalorder %s30, 0
      %p128 = por %p126, %p127
      %p129 = scmp.ne.s32.totalorder %s117, %s118
      %p130 = scmp.eq.s32.totalorder %s31, 1
      %p131 = por %p129, %p130
      %p133 = scmp.ne.s32.totalorder %s118, %s132
      %p134 = scmp.eq.s32.totalorder %s31, 0
      %p135 = por %p133, %p134
      %s137 = sadd.s32 %s136, 1
      %p140 = scmp.eq.s32.totalorder %s25, 1
      %p141 = scmp.ne.s32.totalorder %s136, %s138
      %p142 = scmp.eq.s32.totalorder %s25, 0
      %p143 = por %p141, %p142
      %p144 = scmp.ne.s32.totalorder %s136, %s138
      %p145 = scmp.eq.s32.totalorder %s30, 1
      %p146 = por %p144, %p145
      %p147 = scmp.ne.s32.totalorder %s138, %s139
      %p148 = scmp.eq.s32.totalorder %s30, 0
      %p149 = por %p147, %p148
      %p150 = scmp.ne.s32.totalorder %s138, %s139
      %p151 = scmp.eq.s32.totalorder %s31, 1
      %p152 = por %p150, %p151
      %p154 = scmp.ne.s32.totalorder %s139, %s153
      %p155 = scmp.eq.s32.totalorder %s31, 0
      %p156 = por %p154, %p155
      %s158 = sadd.s32 %s157, 1
      %p161 = scmp.eq.s32.totalorder %s25, 1
      %p162 = scmp.ne.s32.totalorder %s157, %s159
      %p163 = scmp.eq.s32.totalorder %s25, 0
      %p164 = por %p162, %p163
      %p165 = scmp.ne.s32.totalorder %s157, %s159
      %p166 = scmp.eq.s32.totalorder %s30, 1
      %p167 = por %p165, %p166
      %p168 = scmp.ne.s32.totalorder %s159, %s160
      %p169 = scmp.eq.s32.totalorder %s30, 0
      %p170 = por %p168, %p169
      %p171 = scmp.ne.s32.totalorder %s159, %s160
      %p172 = scmp.eq.s32.totalorder %s31, 1
      %p173 = por %p171, %p172
      %p175 = scmp.ne.s32.totalorder %s160, %s174
      %p176 = scmp.eq.s32.totalorder %s31, 0
      %p177 = por %p175, %p176
      %s179 = sadd.s32 %s178, 1
      %p182 = scmp.eq.s32.totalorder %s25, 1
      %p183 = scmp.ne.s32.totalorder %s178, %s180
      %p184 = scmp.eq.s32.totalorder %s25, 0
      %p185 = por %p183, %p184
      %p186 = scmp.ne.s32.totalorder %s178, %s180
      %p187 = scmp.eq.s32.totalorder %s30, 1
      %p188 = por %p186, %p187
      %p189 = scmp.ne.s32.totalorder %s180, %s181
      %p190 = scmp.eq.s32.totalorder %s30, 0
      %p191 = por %p189, %p190
      %p192 = scmp.ne.s32.totalorder %s180, %s181
      %p193 = scmp.eq.s32.totalorder %s31, 1
      %p194 = por %p192, %p193
      %p196 = scmp.ne.s32.totalorder %s181, %s195
      %p197 = scmp.eq.s32.totalorder %s31, 0
      %p198 = por %p196, %p197
      %s200 = sadd.s32 %s199, 1
      %p203 = scmp.eq.s32.totalorder %s25, 1
      %p204 = scmp.ne.s32.totalorder %s199, %s201
      %p205 = scmp.eq.s32.totalorder %s25, 0
      %p206 = por %p204, %p205
      %p207 = scmp.ne.s32.totalorder %s199, %s201
      %p208 = scmp.eq.s32.totalorder %s30, 1
      %p209 = por %p207, %p208
      %p210 = scmp.ne.s32.totalorder %s201, %s202
      %p211 = scmp.eq.s32.totalorder %s30, 0
      %p212 = por %p210, %p211
      %p213 = scmp.ne.s32.totalorder %s201, %s202
      %p214 = scmp.eq.s32.totalorder %s31, 1
      %p215 = por %p213, %p214
      %p217 = scmp.ne.s32.totalorder %s202, %s216
      %p218 = scmp.eq.s32.totalorder %s31, 0
      %p219 = por %p217, %p218
      %s221 = sadd.s32 %s220, 1
      %p224 = scmp.eq.s32.totalorder %s25, 1
      %p225 = scmp.ne.s32.totalorder %s220, %s222
      %p226 = scmp.eq.s32.totalorder %s25, 0
      %p227 = por %p225, %p226
      %p228 = scmp.ne.s32.totalorder %s220, %s222
      %p229 = scmp.eq.s32.totalorder %s30, 1
      %p230 = por %p228, %p229
      %p231 = scmp.ne.s32.totalorder %s222, %s223
      %p232 = scmp.eq.s32.totalorder %s30, 0
      %p233 = por %p231, %p232
      %p234 = scmp.ne.s32.totalorder %s222, %s223
      %p235 = scmp.eq.s32.totalorder %s31, 1
      %p236 = por %p234, %p235
      %p238 = scmp.ne.s32.totalorder %s223, %s237
      %p239 = scmp.eq.s32.totalorder %s31, 0
      %p240 = por %p238, %p239
      %s242 = sadd.s32 %s241, 1
      %p245 = scmp.eq.s32.totalorder %s25, 1
      %p246 = scmp.ne.s32.totalorder %s241, %s243
      %p247 = scmp.eq.s32.totalorder %s25, 0
      %p248 = por %p246, %p247
      %p249 = scmp.ne.s32.totalorder %s241, %s243
      %p250 = scmp.eq.s32.totalorder %s30, 1
      %p251 = por %p249, %p250
      %p252 = scmp.ne.s32.totalorder %s243, %s244
      %p253 = scmp.eq.s32.totalorder %s30, 0
      %p254 = por %p252, %p253
      %p255 = scmp.ne.s32.totalorder %s243, %s244
      %p256 = scmp.eq.s32.totalorder %s31, 1
      %p257 = por %p255, %p256
      %p259 = scmp.ne.s32.totalorder %s244, %s258
      %p260 = scmp.eq.s32.totalorder %s31, 0
      %p261 = por %p259, %p260
      %s263 = sadd.s32 %s262, 1
      %p266 = scmp.eq.s32.totalorder %s25, 1
      %p267 = scmp.ne.s32.totalorder %s262, %s264
      %p268 = scmp.eq.s32.totalorder %s25, 0
      %p269 = por %p267, %p268
      %p270 = scmp.ne.s32.totalorder %s262, %s264
      %p271 = scmp.eq.s32.totalorder %s30, 1
      %p272 = por %p270, %p271
      %p273 = scmp.ne.s32.totalorder %s264, %s265
      %p274 = scmp.eq.s32.totalorder %s30, 0
      %p275 = por %p273, %p274
      %p276 = scmp.ne.s32.totalorder %s264, %s265
      %p277 = scmp.eq.s32.totalorder %s31, 1
      %p278 = por %p276, %p277
      %p280 = scmp.ne.s32.totalorder %s265, %s279
      %p281 = scmp.eq.s32.totalorder %s31, 0
      %p282 = por %p280, %p281
      %s283 = ssub.s32 %s32, %s44
      %p284 = scmp.eq.s32.totalorder %s283, 0
      %s286 = sadd.s32 %s285, 1
      %s287 = scalar_select %p284, %s285, %s286
      %p290 = pneg %p284
      %p291 = scmp.eq.s32.totalorder %s25, 1
      %p292 = por %p290, %p291
      %p293 = scmp.ne.s32.totalorder %s285, %s288
      %p294 = scmp.eq.s32.totalorder %s25, 0
      %p295 = por %p293, %p294
      %p296 = scmp.ne.s32.totalorder %s285, %s288
      %p297 = scmp.eq.s32.totalorder %s30, 1
      %p298 = por %p296, %p297
      %p299 = scmp.ne.s32.totalorder %s288, %s289
      %p300 = scmp.eq.s32.totalorder %s30, 0
      %p301 = por %p299, %p300
      %p302 = scmp.ne.s32.totalorder %s288, %s289
      %p303 = scmp.eq.s32.totalorder %s31, 1
      %p304 = por %p302, %p303
      %p306 = scmp.ne.s32.totalorder %s289, %s305
      %p307 = scmp.eq.s32.totalorder %s31, 0
      %p308 = por %p306, %p307
      %s309 = ssub.s32 %s32, %s44
      %p310 = scmp.eq.s32.totalorder %s309, 0
      %s312 = sadd.s32 %s311, 1
      %s313 = scalar_select %p310, %s311, %s312
      %p316 = pneg %p310
      %p317 = scmp.eq.s32.totalorder %s25, 1
      %p318 = por %p316, %p317
      %p319 = scmp.ne.s32.totalorder %s311, %s314
      %p320 = scmp.eq.s32.totalorder %s25, 0
      %p321 = por %p319, %p320
      %p322 = scmp.ne.s32.totalorder %s311, %s314
      %p323 = scmp.eq.s32.totalorder %s30, 1
      %p324 = por %p322, %p323
      %p325 = scmp.ne.s32.totalorder %s314, %s315
      %p326 = scmp.eq.s32.totalorder %s30, 0
      %p327 = por %p325, %p326
      %p328 = scmp.ne.s32.totalorder %s314, %s315
      %p329 = scmp.eq.s32.totalorder %s31, 1
      %p330 = por %p328, %p329
      %p332 = scmp.ne.s32.totalorder %s315, %s331
      %p333 = scmp.eq.s32.totalorder %s31, 0
      %p334 = por %p332, %p333
      %p335 = scmp.le.s32.totalorder 1, %s25
      %p336 = scmp.lt.s32.totalorder %s25, 3
      %p337 = pnand %p335, %p336
      %p338 = pneg %p337
      // Predicated region
      $region9: #{efficientnet_centerloss_forward.1} parent=5 // pred_check
        _
      $region10: #{efficientnet_centerloss_forward.1} parent=5 // pred_check_branch
        %340 = sbr.rel (%p337) target = $region12
      $region11: #{efficientnet_centerloss_forward.1} parent=5 // pred_region
        %s341 = ssub.s32 %s25, 1
        // Predicated region
        $region13: #{efficientnet_centerloss_forward.1} parent=11 // pred_check
          %p342 = pneg %p86
        $region14: #{efficientnet_centerloss_forward.1} parent=11 // pred_check_branch
          %344 = sbr.rel (%p342) target = $region16
        $region15: #{efficientnet_centerloss_forward.1} parent=11 // pred_region
          _
        $region16: #{efficientnet_centerloss_forward.1} parent=11 // pred_fallthru
          _
        // Predicated region
        $region17: #{efficientnet_centerloss_forward.1} parent=11 // pred_check
          %p345 = pneg %p107
        $region18: #{efficientnet_centerloss_forward.1} parent=11 // pred_check_branch
          %347 = sbr.rel (%p345) target = $region20
        $region19: #{efficientnet_centerloss_forward.1} parent=11 // pred_region
          _
        $region20: #{efficientnet_centerloss_forward.1} parent=11 // pred_fallthru
          _
        // Predicated region
        $region21: #{efficientnet_centerloss_forward.1} parent=11 // pred_check
          %p348 = pneg %p128
        $region22: #{efficientnet_centerloss_forward.1} parent=11 // pred_check_branch
          %350 = sbr.rel (%p348) target = $region24
        $region23: #{efficientnet_centerloss_forward.1} parent=11 // pred_region
          _
        $region24: #{efficientnet_centerloss_forward.1} parent=11 // pred_fallthru
          _
        // Predicated region
        $region25: #{efficientnet_centerloss_forward.1} parent=11 // pred_check
          %p351 = pneg %p149
        $region26: #{efficientnet_centerloss_forward.1} parent=11 // pred_check_branch
          %353 = sbr.rel (%p351) target = $region28
        $region27: #{efficientnet_centerloss_forward.1} parent=11 // pred_region
          _
        $region28: #{efficientnet_centerloss_forward.1} parent=11 // pred_fallthru
          _
        // Predicated region
        $region29: #{efficientnet_centerloss_forward.1} parent=11 // pred_check
          %p354 = pneg %p170
        $region30: #{efficientnet_centerloss_forward.1} parent=11 // pred_check_branch
          %356 = sbr.rel (%p354) target = $region32
        $region31: #{efficientnet_centerloss_forward.1} parent=11 // pred_region
          _
        $region32: #{efficientnet_centerloss_forward.1} parent=11 // pred_fallthru
          _
        // Predicated region
        $region33: #{efficientnet_centerloss_forward.1} parent=11 // pred_check
          %p357 = pneg %p191
        $region34: #{efficientnet_centerloss_forward.1} parent=11 // pred_check_branch
          %359 = sbr.rel (%p357) target = $region36
        $region35: #{efficientnet_centerloss_forward.1} parent=11 // pred_region
          _
        $region36: #{efficientnet_centerloss_forward.1} parent=11 // pred_fallthru
          _
        // Predicated region
        $region37: #{efficientnet_centerloss_forward.1} parent=11 // pred_check
          %p360 = pneg %p212
        $region38: #{efficientnet_centerloss_forward.1} parent=11 // pred_check_branch
          %362 = sbr.rel (%p360) target = $region40
        $region39: #{efficientnet_centerloss_forward.1} parent=11 // pred_region
          _
        $region40: #{efficientnet_centerloss_forward.1} parent=11 // pred_fallthru
          _
        // Predicated region
        $region41: #{efficientnet_centerloss_forward.1} parent=11 // pred_check
          %p363 = pneg %p233
        $region42: #{efficientnet_centerloss_forward.1} parent=11 // pred_check_branch
          %365 = sbr.rel (%p363) target = $region44
        $region43: #{efficientnet_centerloss_forward.1} parent=11 // pred_region
          _
        $region44: #{efficientnet_centerloss_forward.1} parent=11 // pred_fallthru
          _
        // Predicated region
        $region45: #{efficientnet_centerloss_forward.1} parent=11 // pred_check
          %p366 = pneg %p254
        $region46: #{efficientnet_centerloss_forward.1} parent=11 // pred_check_branch
          %368 = sbr.rel (%p366) target = $region48
        $region47: #{efficientnet_centerloss_forward.1} parent=11 // pred_region
          _
        $region48: #{efficientnet_centerloss_forward.1} parent=11 // pred_fallthru
          _
        // Predicated region
        $region49: #{efficientnet_centerloss_forward.1} parent=11 // pred_check
          %p369 = pneg %p275
        $region50: #{efficientnet_centerloss_forward.1} parent=11 // pred_check_branch
          %371 = sbr.rel (%p369) target = $region52
        $region51: #{efficientnet_centerloss_forward.1} parent=11 // pred_region
          _
        $region52: #{efficientnet_centerloss_forward.1} parent=11 // pred_fallthru
          _
      $region12: #{efficientnet_centerloss_forward.1} parent=5 // pred_fallthru
        _
      %p372 = scmp.lt.s32.totalorder %s25, 2
      // Predicated region
      $region53: #{efficientnet_centerloss_forward.1} parent=5 // pred_check
        %p373 = pneg %p372
      $region54: #{efficientnet_centerloss_forward.1} parent=5 // pred_check_branch
        %375 = sbr.rel (%p373) target = $region56
      $region55: #{efficientnet_centerloss_forward.1} parent=5 // pred_region
        // Predicated region
        $region57: #{efficientnet_centerloss_forward.1} parent=55 // pred_check
          %p376 = pneg %p59
        $region58: #{efficientnet_centerloss_forward.1} parent=55 // pred_check_branch
          %378 = sbr.rel (%p376) target = $region60
        $region59: #{efficientnet_centerloss_forward.1} parent=55 // pred_region
          %s379 = smul.u32 8, %s33
          %p380 = scmp.lt.s32.totalorder %s32, 1
          %s381 = scalar_select %p380, %s32, 1
          %p382 = scmp.lt.s32.totalorder %s379, 7
          %s383 = scalar_select %p382, %s379, 7
          %s384 = smul.addr %s381, 8
          %s385 = sadd.s32 %s383, %s384
          %s386 = smul.addr %s385, 4
          %s387 = scalar_lea.vmem %s0, %s386
          %s388 = smul.u32 8, %s33
        $region60: #{efficientnet_centerloss_forward.1} parent=55 // pred_fallthru
          _
      $region56: #{efficientnet_centerloss_forward.1} parent=5 // pred_fallthru
        _
      %p389 = scmp.le.s32.totalorder 1, %s25
      %p390 = scmp.lt.s32.totalorder %s25, 3
      %p391 = pnand %p389, %p390
      %p392 = pneg %p391
      // Predicated region
      $region61: #{efficientnet_centerloss_forward.1} parent=5 // pred_check
        _
      $region62: #{efficientnet_centerloss_forward.1} parent=5 // pred_check_branch
        %394 = sbr.rel (%p391) target = $region64
      $region63: #{efficientnet_centerloss_forward.1} parent=5 // pred_region
        %s395 = ssub.s32 %s25, 1
        %s396 = smul.u32 8, %s35
        %p397 = scmp.lt.s32.totalorder %s34, 1
        %s398 = scalar_select %p397, %s34, 1
        %p399 = scmp.lt.s32.totalorder %s396, 7
        %s400 = scalar_select %p399, %s396, 7
        %s401 = smul.addr %s398, 8
        %s402 = sadd.s32 %s400, %s401
        %s403 = smul.addr %s402, 4
        %s404 = scalar_lea.vmem %s0, %s403
        %p405 = pneg %p65
        %p406 = pneg %p62
        %p407 = pneg %p86
        %p408 = pneg %p83
        %p409 = pneg %p107
        %p410 = pneg %p104
        %p411 = pneg %p128
        %p412 = pneg %p125
        %p413 = pneg %p149
        %p414 = pneg %p146
        %p415 = pneg %p170
        %p416 = pneg %p167
        %p417 = pneg %p191
        %p418 = pneg %p188
        %p419 = pneg %p212
        %p420 = pneg %p209
        %p421 = pneg %p233
        %p422 = pneg %p230
        %p423 = pneg %p254
        %p424 = pneg %p251
        %p425 = pneg %p275
        %p426 = pneg %p272
        %p427 = pneg %p301
        %p428 = pneg %p298
        %s429 = sand.u32 %s288, 1
        %s430 = scalar_lea.sflag [#allocation4], %s429
        %s431 = sand.u32 %s288, 1
        %s432 = scalar_lea.vmem [#allocation3], %s431
        %p433 = pneg %p327
        %p434 = pneg %p324
        %s435 = sand.u32 %s314, 1
        %s436 = scalar_lea.sflag [#allocation6], %s435
        %s437 = sand.u32 %s314, 1
        %s438 = scalar_lea.vmem [#allocation5], %s437
        %s439 = smul.u32 8, %s35
        %p440 = scmp.lt.s32.totalorder %s34, 1
        %s441 = scalar_select %p440, %s34, 1
        %p442 = scmp.lt.s32.totalorder %s439, 7
        %s443 = scalar_select %p442, %s439, 7
        %s444 = smul.addr %s441, 8
        %s445 = sadd.s32 %s443, %s444
        %s446 = smul.addr %s445, 4
        %s447 = scalar_lea.vmem %s0, %s446
        %s448 = smul.u32 8, %s35
        %p450 = scmp.eq.s32.totalorder %s35, 0
        // Predicated region
        $region65: #{efficientnet_centerloss_forward.1} parent=63 // pred_check
          %p451 = pneg %p450
        $region66: #{efficientnet_centerloss_forward.1} parent=63 // pred_check_branch
          %453 = sbr.rel (%p451) target = $region68
        $region67: #{efficientnet_centerloss_forward.1} parent=63 // pred_region
          %vm454 = vcmask 253952
          %455 = vst.msk [vmem:[#allocation2] sm:$0x1] %vm454, 0.0
        $region68: #{efficientnet_centerloss_forward.1} parent=63 // pred_fallthru
          _
        %v456 = vld [vmem:[%s447] sm:$0xf]
        %v457 = vld [vmem:[%s447 + $0x4] sm:$0xf]
        %v458 = vld [vmem:[%s447 + $0x8] sm:$0xf]
        %v459 = vld [vmem:[%s447 + $0xc] sm:$0xf]
        %v460 = vld [vmem:[%s447 + $0x10] sm:$0xf]
        %v461 = vld [vmem:[%s447 + $0x14] sm:$0xf]
        %v462 = vld [vmem:[%s447 + $0x18] sm:$0xf]
        %v463 = vld [vmem:[%s447 + $0x1c] sm:$0xf]
        %v464 = vld [vmem:[%s1] sm:$0xf]
        %v465 = vld [vmem:[%s1 + $0x4] sm:$0xf]
        %v466 = vld [vmem:[%s1 + $0x8] sm:$0xf]
        %v467 = vld [vmem:[%s1 + $0xc] sm:$0xf]
        %v468 = vld [vmem:[%s1 + $0x10] sm:$0xf]
        %v469 = vld [vmem:[%s1 + $0x14] sm:$0xf]
        %v470 = vld [vmem:[%s1 + $0x18] sm:$0xf]
        %v471 = vld [vmem:[%s1 + $0x1c] sm:$0xf]
        %v472 = vld [vmem:[%s2] sm:$0x1]
        %v474 = vlaneseq
        %v475 = vshrl.u32 %v474, 7
        %v476 = vsub.s32 0, %v475
        %v477 = vrot.slane %v472, %v476
        %v487 = vunpack.c.l.b16 %v456
        %v488 = vunpack.c.l.b16 %v457
        %v489 = vunpack.c.l.b16 %v458
        %v490 = vunpack.c.l.b16 %v459
        %v491 = vunpack.c.l.b16 %v460
        %v492 = vunpack.c.l.b16 %v461
        %v493 = vunpack.c.l.b16 %v462
        %v494 = vunpack.c.l.b16 %v463
        %v495 = vpack.c.b16 %v488, %v487
        %v496 = vpack.c.b16 %v490, %v489
        %v497 = vpack.c.b16 %v492, %v491
        %v498 = vpack.c.b16 %v494, %v493
        %v507 = vunpack.c.l.b16 %v464
        %v508 = vunpack.c.l.b16 %v465
        %v509 = vunpack.c.l.b16 %v466
        %v510 = vunpack.c.l.b16 %v467
        %v511 = vunpack.c.l.b16 %v468
        %v512 = vunpack.c.l.b16 %v469
        %v513 = vunpack.c.l.b16 %v470
        %v514 = vunpack.c.l.b16 %v471
        %v515 = vpack.c.b16 %v508, %v507
        %v516 = vpack.c.b16 %v510, %v509
        %v517 = vpack.c.b16 %v512, %v511
        %v518 = vpack.c.b16 %v514, %v513
        %vm523 = vcmask 523264
        %v525 = vsel %vm523, %v495, 0
        %v528 = vsel %vm523, %v496, 0
        %v531 = vsel %vm523, %v497, 0
        %v534 = vsel %vm523, %v498, 0
        %536 = vmatprep.subr.bf16.mxu0 0
        %537 = vmatpush1.bf16.msra.mxu0 %v515
        %538 = vmatprep.subr.bf16.mxu0 0
        %539 = vmatpush1.bf16.msra.mxu0 %v516
        %540 = vmatprep.subr.bf16.mxu0 0
        %541 = vmatpush1.bf16.msra.mxu0 %v517
        %542 = vmatprep.subr.bf16.mxu0 0
        %543 = vmatpush1.bf16.msra.mxu0 %v518
        %544 = vmatprep.subr.bf16.mxu0 0
        %545 = vmatpush1.bf16.msra.mxu0 0
        %546 = vmatprep.subr.bf16.mxu0 0
        %547 = vmatpush1.bf16.msra.mxu0 0
        %548 = vmatprep.subr.bf16.mxu0 0
        %549 = vmatpush1.bf16.msra.mxu0 0
        %550 = vmatprep.subr.bf16.mxu0 0
        %551 = vmatpush1.bf16.msra.mxu0 0
        %552 = vmatprep.subr.bf16.mxu0 0
        %553 = vmatpush1.bf16.msra.mxu0 0
        %554 = vmatprep.subr.bf16.mxu0 0
        %555 = vmatpush1.bf16.msra.mxu0 0
        %556 = vmatprep.subr.bf16.mxu0 0
        %557 = vmatpush1.bf16.msra.mxu0 0
        %558 = vmatprep.subr.bf16.mxu0 0
        %559 = vmatpush1.bf16.msra.mxu0 0
        %560 = vmatprep.subr.bf16.mxu0 0
        %561 = vmatpush1.bf16.msra.mxu0 0
        %562 = vmatprep.subr.bf16.mxu0 0
        %563 = vmatpush1.bf16.msra.mxu0 0
        %564 = vmatprep.subr.bf16.mxu0 0
        %565 = vmatpush1.bf16.msra.mxu0 0
        %566 = vmatprep.subr.bf16.mxu0 0
        %567 = vmatpush1.bf16.msra.mxu0 0
        %568 = vmatprep.mubr.bf16.mxu0 0
        %569 = vmatmul.mubr.bf16.gmra.mrb[0].mxu0 %v525
        %v570 = vpop.f32.mrb[0].mxu0
        %v571 = vadd.f32 %v477, %v570
        %v572 = vpop.f32.mrb[0].mxu0
        %v573 = vpop.f32.mrb[0].mxu0
        %v574 = vadd.f32 %v477, %v573
        %v575 = vpop.f32.mrb[0].mxu0
        %576 = vmatprep.mubr.bf16.mxu0 0
        %577 = vmatmul.mubr.bf16.gmra.mrb[0].mxu0 %v528
        %v578 = vpop.f32.mrb[0].mxu0
        %v579 = vadd.f32 %v477, %v578
        %v580 = vpop.f32.mrb[0].mxu0
        %v581 = vpop.f32.mrb[0].mxu0
        %v582 = vadd.f32 %v477, %v581
        %v583 = vpop.f32.mrb[0].mxu0
        %584 = vmatprep.mubr.bf16.mxu0 0
        %585 = vmatmul.mubr.bf16.gmra.mrb[0].mxu0 %v531
        %v586 = vpop.f32.mrb[0].mxu0
        %v587 = vadd.f32 %v477, %v586
        %v588 = vpop.f32.mrb[0].mxu0
        %v589 = vpop.f32.mrb[0].mxu0
        %v590 = vadd.f32 %v477, %v589
        %v591 = vpop.f32.mrb[0].mxu0
        %592 = vmatprep.mubr.bf16.mxu0 0
        %593 = vmatmul.mubr.bf16.gmra.mrb[0].mxu0 %v534
        %v594 = vpop.f32.mrb[0].mxu0
        %v595 = vadd.f32 %v477, %v594
        %v596 = vpop.f32.mrb[0].mxu0
        %v597 = vpop.f32.mrb[0].mxu0
        %v598 = vadd.f32 %v477, %v597
        %v599 = vpop.f32.mrb[0].mxu0
        %600 = vdwg.mxu0
        %v601 = vxor.u32 %v571, 2147483648
        %v602 = vxor.u32 %v574, 2147483648
        %v603 = vxor.u32 %v579, 2147483648
        %v604 = vxor.u32 %v582, 2147483648
        %v605 = vxor.u32 %v587, 2147483648
        %v606 = vxor.u32 %v590, 2147483648
        %v607 = vxor.u32 %v595, 2147483648
        %v608 = vxor.u32 %v598, 2147483648
        %v609 = vmul.f32 %v601, 1.442695
        %v610 = vpow.pop %v609
        %v611 = vmul.f32 %v602, 1.442695
        %v612 = vpow.pop %v611
        %v613 = vmul.f32 %v603, 1.442695
        %v614 = vpow.pop %v613
        %v615 = vmul.f32 %v604, 1.442695
        %v616 = vpow.pop %v615
        %v617 = vmul.f32 %v605, 1.442695
        %v618 = vpow.pop %v617
        %v619 = vmul.f32 %v606, 1.442695
        %v620 = vpow.pop %v619
        %v621 = vmul.f32 %v607, 1.442695
        %v622 = vpow.pop %v621
        %v623 = vmul.f32 %v608, 1.442695
        %v624 = vpow.pop %v623
        %v625 = vadd.f32 %v610, 1.0
        %v626 = vadd.f32 %v612, 1.0
        %v627 = vadd.f32 %v614, 1.0
        %v628 = vadd.f32 %v616, 1.0
        %v629 = vadd.f32 %v618, 1.0
        %v630 = vadd.f32 %v620, 1.0
        %v631 = vadd.f32 %v622, 1.0
        %v632 = vadd.f32 %v624, 1.0
        %v633 = vrcp.pop %v625
        %v634 = vmul.f32 1.0, %v633
        %v635 = vrcp.pop %v626
        %v636 = vmul.f32 1.0, %v635
        %v637 = vrcp.pop %v627
        %v638 = vmul.f32 1.0, %v637
        %v639 = vrcp.pop %v628
        %v640 = vmul.f32 1.0, %v639
        %v641 = vrcp.pop %v629
        %v642 = vmul.f32 1.0, %v641
        %v643 = vrcp.pop %v630
        %v644 = vmul.f32 1.0, %v643
        %v645 = vrcp.pop %v631
        %v646 = vmul.f32 1.0, %v645
        %v647 = vrcp.pop %v632
        %v648 = vmul.f32 1.0, %v647
        %v649 = vmul.f32 %v571, %v634
        %v650 = vmul.f32 %v574, %v636
        %v651 = vmul.f32 %v579, %v638
        %v652 = vmul.f32 %v582, %v640
        %v653 = vmul.f32 %v587, %v642
        %v654 = vmul.f32 %v590, %v644
        %v655 = vmul.f32 %v595, %v646
        %v656 = vmul.f32 %v598, %v648
        %v657 = vld [vmem:[#allocation2] sm:$0x1]
        %vm658 = vcmask 261120
        %v659 = vsel %vm658, %v649, 0.0
        %v660 = vsel %vm658, %v650, 0.0
        %v661 = vadd.f32 %v659, %v660
        %v662 = vsel %vm658, %v651, 0.0
        %v663 = vadd.f32 %v661, %v662
        %v664 = vsel %vm658, %v652, 0.0
        %v665 = vadd.f32 %v663, %v664
        %v666 = vsel %vm658, %v653, 0.0
        %v667 = vadd.f32 %v665, %v666
        %v668 = vsel %vm658, %v654, 0.0
        %v669 = vadd.f32 %v667, %v668
        %v670 = vsel %vm658, %v655, 0.0
        %v671 = vadd.f32 %v669, %v670
        %v672 = vsel %vm658, %v656, 0.0
        %v673 = vadd.f32 %v671, %v672
        %v674 = vrot.slane %v673, 4
        %v675 = vadd.f32 %v673, %v674
        %v676 = vrot.slane %v675, 2
        %v677 = vadd.f32 %v675, %v676
        %v678 = vrot.slane %v677, 1
        %v679 = vadd.f32 %v677, %v678
        %v680 = vadd.f32 %v657, %v679
        %vm681 = vcmask 253952
        %682 = vst.msk [vmem:[#allocation2] sm:$0x1] %vm681, %v680
        // Predicated region
        $region69: #{efficientnet_centerloss_forward.1} parent=63 // pred_check
          %p683 = pneg %p450
        $region70: #{efficientnet_centerloss_forward.1} parent=63 // pred_check_branch
          %685 = sbr.rel (%p683) target = $region72
        $region71: #{efficientnet_centerloss_forward.1} parent=63 // pred_region
          %v686 = vld [vmem:[#allocation2] sm:$0x1]
          %v687 = vmul.f32 %v686, 0.015625
          %v688 = vpack.c.bf16 %v687, %v687
          %v689 = vld [vmem:[%s3] sm:$0xff]
          %v690 = vld [vmem:[%s3 + $0x8] sm:$0xff]
          %v691 = vld [vmem:[%s3 + $0x10] sm:$0xff]
          %v692 = vld [vmem:[%s3 + $0x18] sm:$0xff]
          %v693 = vld [vmem:[%s3 + $0x20] sm:$0xff]
          %v694 = vld [vmem:[%s3 + $0x28] sm:$0xff]
          %v695 = vld [vmem:[%s3 + $0x30] sm:$0xff]
          %v696 = vld [vmem:[%s3 + $0x38] sm:$0xff]
          %v697 = vld [vmem:[%s4] sm:$0xf]
          %v706 = vunpack.c.l.b16 %v689
          %v707 = vunpack.c.h.b16 %v689
          %v708 = vunpack.c.l.b16 %v690
          %v709 = vunpack.c.h.b16 %v690
          %v710 = vunpack.c.l.b16 %v691
          %v711 = vunpack.c.h.b16 %v691
          %v712 = vunpack.c.l.b16 %v692
          %v713 = vunpack.c.h.b16 %v692
          %v714 = vunpack.c.l.b16 %v693
          %v715 = vunpack.c.h.b16 %v693
          %v716 = vunpack.c.l.b16 %v694
          %v717 = vunpack.c.h.b16 %v694
          %v718 = vunpack.c.l.b16 %v695
          %v719 = vunpack.c.h.b16 %v695
          %v720 = vunpack.c.l.b16 %v696
          %v721 = vunpack.c.h.b16 %v696
          %v722 = vpack.c.b16 %v710, %v706
          %v723 = vpack.c.b16 %v711, %v707
          %v724 = vpack.c.b16 %v712, %v708
          %v725 = vpack.c.b16 %v713, %v709
          %v726 = vpack.c.b16 %v718, %v714
          %v727 = vpack.c.b16 %v719, %v715
          %v728 = vpack.c.b16 %v720, %v716
          %v729 = vpack.c.b16 %v721, %v717
          %v739 = vlaneseq
          %v740 = vshrl.u32 %v739, 7
          %v741 = vsub.s32 0, %v740
          %v742 = vrot.slane %v697, %v741
          %v743 = vlaneseq
          %v744 = vshrl.u32 %v743, 7
          %v745 = vsub.s32 1, %v744
          %v746 = vrot.slane %v697, %v745
          %v747 = vlaneseq
          %v748 = vshrl.u32 %v747, 7
          %v749 = vsub.s32 2, %v748
          %v750 = vrot.slane %v697, %v749
          %v751 = vlaneseq
          %v752 = vshrl.u32 %v751, 7
          %v753 = vsub.s32 3, %v752
          %v754 = vrot.slane %v697, %v753
          %v760 = vsel %vm658, %v688, 0
          %762 = vmatprep.subr.bf16.mxu0 %v723
          %763 = vmatpush1.bf16.msra.mxu0 %v722
          %764 = vmatprep.subr.bf16.mxu0 %v727
          %765 = vmatpush1.bf16.msra.mxu0 %v726
          %766 = vmatprep.subr.bf16.mxu0 0
          %767 = vmatpush1.bf16.msra.mxu0 0
          %768 = vmatprep.subr.bf16.mxu0 0
          %769 = vmatpush1.bf16.msra.mxu0 0
          %770 = vmatprep.subr.bf16.mxu0 0
          %771 = vmatpush1.bf16.msra.mxu0 0
          %772 = vmatprep.subr.bf16.mxu0 0
          %773 = vmatpush1.bf16.msra.mxu0 0
          %774 = vmatprep.subr.bf16.mxu0 0
          %775 = vmatpush1.bf16.msra.mxu0 0
          %776 = vmatprep.subr.bf16.mxu0 0
          %777 = vmatpush1.bf16.msra.mxu0 0
          %778 = vmatprep.subr.bf16.mxu0 0
          %779 = vmatpush1.bf16.msra.mxu0 0
          %780 = vmatprep.subr.bf16.mxu0 0
          %781 = vmatpush1.bf16.msra.mxu0 0
          %782 = vmatprep.subr.bf16.mxu0 0
          %783 = vmatpush1.bf16.msra.mxu0 0
          %784 = vmatprep.subr.bf16.mxu0 0
          %785 = vmatpush1.bf16.msra.mxu0 0
          %786 = vmatprep.subr.bf16.mxu0 0
          %787 = vmatpush1.bf16.msra.mxu0 0
          %788 = vmatprep.subr.bf16.mxu0 0
          %789 = vmatpush1.bf16.msra.mxu0 0
          %790 = vmatprep.subr.bf16.mxu0 0
          %791 = vmatpush1.bf16.msra.mxu0 0
          %792 = vmatprep.subr.bf16.mxu0 0
          %793 = vmatpush1.bf16.msra.mxu0 0
          %794 = vmatprep.mubr.bf16.mxu0 0
          %795 = vmatmul.mubr.bf16.gmra.mrb[0].mxu0 %v760
          %v796 = vpop.f32.mrb[0].mxu0
          %v797 = vadd.f32 %v742, %v796
          %v798 = vpop.f32.mrb[0].mxu0
          %v799 = vadd.f32 %v746, %v798
          %v800 = vpop.f32.mrb[0].mxu0
          %v801 = vpop.f32.mrb[0].mxu0
          %802 = vdwg.mxu0
          %803 = vmatprep.subr.bf16.mxu0 %v725
          %804 = vmatpush1.bf16.msra.mxu0 %v724
          %805 = vmatprep.subr.bf16.mxu0 %v729
          %806 = vmatpush1.bf16.msra.mxu0 %v728
          %807 = vmatprep.subr.bf16.mxu0 0
          %808 = vmatpush1.bf16.msra.mxu0 0
          %809 = vmatprep.subr.bf16.mxu0 0
          %810 = vmatpush1.bf16.msra.mxu0 0
          %811 = vmatprep.subr.bf16.mxu0 0
          %812 = vmatpush1.bf16.msra.mxu0 0
          %813 = vmatprep.subr.bf16.mxu0 0
          %814 = vmatpush1.bf16.msra.mxu0 0
          %815 = vmatprep.subr.bf16.mxu0 0
          %816 = vmatpush1.bf16.msra.mxu0 0
          %817 = vmatprep.subr.bf16.mxu0 0
          %818 = vmatpush1.bf16.msra.mxu0 0
          %819 = vmatprep.subr.bf16.mxu0 0
          %820 = vmatpush1.bf16.msra.mxu0 0
          %821 = vmatprep.subr.bf16.mxu0 0
          %822 = vmatpush1.bf16.msra.mxu0 0
          %823 = vmatprep.subr.bf16.mxu0 0
          %824 = vmatpush1.bf16.msra.mxu0 0
          %825 = vmatprep.subr.bf16.mxu0 0
          %826 = vmatpush1.bf16.msra.mxu0 0
          %827 = vmatprep.subr.bf16.mxu0 0
          %828 = vmatpush1.bf16.msra.mxu0 0
          %829 = vmatprep.subr.bf16.mxu0 0
          %830 = vmatpush1.bf16.msra.mxu0 0
          %831 = vmatprep.subr.bf16.mxu0 0
          %832 = vmatpush1.bf16.msra.mxu0 0
          %833 = vmatprep.subr.bf16.mxu0 0
          %834 = vmatpush1.bf16.msra.mxu0 0
          %835 = vmatprep.mubr.bf16.mxu0 0
          %836 = vmatmul.mubr.bf16.gmra.mrb[0].mxu0 %v760
          %v837 = vpop.f32.mrb[0].mxu0
          %v838 = vadd.f32 %v750, %v837
          %v839 = vpop.f32.mrb[0].mxu0
          %v840 = vadd.f32 %v754, %v839
          %v841 = vpop.f32.mrb[0].mxu0
          %v842 = vpop.f32.mrb[0].mxu0
          %843 = vdwg.mxu0
          %v844 = vpack.c.bf16 %v797, %v797
          %v845 = vpack.c.bf16 %v799, %v799
          %v846 = vpack.c.bf16 %v838, %v838
          %v847 = vpack.c.bf16 %v840, %v840
          %v848 = vld [vmem:[%s5] sm:$0xf]
          %v849 = vld [vmem:[%s5 + $0x4] sm:$0xf]
          %v850 = vld [vmem:[%s5 + $0x8] sm:$0xf]
          %v851 = vld [vmem:[%s5 + $0xc] sm:$0xf]
          %v852 = vld [vmem:[%s5 + $0x10] sm:$0xf]
          %v853 = vld [vmem:[%s5 + $0x14] sm:$0xf]
          %v854 = vld [vmem:[%s5 + $0x18] sm:$0xf]
          %v855 = vld [vmem:[%s5 + $0x1c] sm:$0xf]
          %v856 = vld [vmem:[%s5 + $0x20] sm:$0xf]
          %v857 = vld [vmem:[%s5 + $0x24] sm:$0xf]
          %v858 = vld [vmem:[%s5 + $0x28] sm:$0xf]
          %v859 = vld [vmem:[%s5 + $0x2c] sm:$0xf]
          %v860 = vld [vmem:[%s5 + $0x30] sm:$0xf]
          %v861 = vld [vmem:[%s5 + $0x34] sm:$0xf]
          %v862 = vld [vmem:[%s5 + $0x38] sm:$0xf]
          %v863 = vld [vmem:[%s5 + $0x3c] sm:$0xf]
          %v864 = vld [vmem:[%s5 + $0x40] sm:$0xf]
          %v865 = vld [vmem:[%s5 + $0x44] sm:$0xf]
          %v866 = vld [vmem:[%s5 + $0x48] sm:$0xf]
          %v867 = vld [vmem:[%s5 + $0x4c] sm:$0xf]
          %v868 = vld [vmem:[%s5 + $0x50] sm:$0xf]
          %v869 = vld [vmem:[%s5 + $0x54] sm:$0xf]
          %v870 = vld [vmem:[%s5 + $0x58] sm:$0xf]
          %v871 = vld [vmem:[%s5 + $0x5c] sm:$0xf]
          %v872 = vld [vmem:[%s5 + $0x60] sm:$0xf]
          %v873 = vld [vmem:[%s5 + $0x64] sm:$0xf]
          %v874 = vld [vmem:[%s5 + $0x68] sm:$0xf]
          %v875 = vld [vmem:[%s5 + $0x6c] sm:$0xf]
          %v876 = vld [vmem:[%s5 + $0x70] sm:$0xf]
          %v877 = vld [vmem:[%s5 + $0x74] sm:$0xf]
          %v878 = vld [vmem:[%s5 + $0x78] sm:$0xf]
          %v879 = vld [vmem:[%s5 + $0x7c] sm:$0xf]
          %v880 = vld [vmem:[%s5 + $0x80] sm:$0xf]
          %v881 = vld [vmem:[%s5 + $0x84] sm:$0xf]
          %v882 = vld [vmem:[%s5 + $0x88] sm:$0xf]
          %v883 = vld [vmem:[%s5 + $0x8c] sm:$0xf]
          %v884 = vld [vmem:[%s5 + $0x90] sm:$0xf]
          %v885 = vld [vmem:[%s5 + $0x94] sm:$0xf]
          %v886 = vld [vmem:[%s5 + $0x98] sm:$0xf]
          %v887 = vld [vmem:[%s5 + $0x9c] sm:$0xf]
          %v888 = vld [vmem:[%s5 + $0xa0] sm:$0xf]
          %v889 = vld [vmem:[%s5 + $0xa4] sm:$0xf]
          %v890 = vld [vmem:[%s5 + $0xa8] sm:$0xf]
          %v891 = vld [vmem:[%s5 + $0xac] sm:$0xf]
          %v892 = vld [vmem:[%s5 + $0xb0] sm:$0xf]
          %v893 = vld [vmem:[%s5 + $0xb4] sm:$0xf]
          %v894 = vld [vmem:[%s5 + $0xb8] sm:$0xf]
          %v895 = vld [vmem:[%s5 + $0xbc] sm:$0xf]
          %v896 = vld [vmem:[%s5 + $0xc0] sm:$0xf]
          %v897 = vld [vmem:[%s5 + $0xc4] sm:$0xf]
          %v898 = vld [vmem:[%s5 + $0xc8] sm:$0xf]
          %v899 = vld [vmem:[%s5 + $0xcc] sm:$0xf]
          %v900 = vld [vmem:[%s5 + $0xd0] sm:$0xf]
          %v901 = vld [vmem:[%s5 + $0xd4] sm:$0xf]
          %v902 = vld [vmem:[%s5 + $0xd8] sm:$0xf]
          %v903 = vld [vmem:[%s5 + $0xdc] sm:$0xf]
          %v904 = vld [vmem:[%s5 + $0xe0] sm:$0xf]
          %v905 = vld [vmem:[%s5 + $0xe4] sm:$0xf]
          %v906 = vld [vmem:[%s5 + $0xe8] sm:$0xf]
          %v907 = vld [vmem:[%s5 + $0xec] sm:$0xf]
          %v908 = vld [vmem:[%s5 + $0xf0] sm:$0xf]
          %v909 = vld [vmem:[%s5 + $0xf4] sm:$0xf]
          %v910 = vld [vmem:[%s5 + $0xf8] sm:$0xf]
          %v911 = vld [vmem:[%s5 + $0xfc] sm:$0xf]
          %v912 = vld [vmem:[%s6] sm:$0x1]
          %v977 = vunpack.c.l.b16 %v848
          %v978 = vunpack.c.l.b16 %v849
          %v979 = vunpack.c.l.b16 %v850
          %v980 = vunpack.c.l.b16 %v851
          %v981 = vunpack.c.l.b16 %v852
          %v982 = vunpack.c.l.b16 %v853
          %v983 = vunpack.c.l.b16 %v854
          %v984 = vunpack.c.l.b16 %v855
          %v985 = vunpack.c.l.b16 %v856
          %v986 = vunpack.c.l.b16 %v857
          %v987 = vunpack.c.l.b16 %v858
          %v988 = vunpack.c.l.b16 %v859
          %v989 = vunpack.c.l.b16 %v860
          %v990 = vunpack.c.l.b16 %v861
          %v991 = vunpack.c.l.b16 %v862
          %v992 = vunpack.c.l.b16 %v863
          %v993 = vunpack.c.l.b16 %v864
          %v994 = vunpack.c.l.b16 %v865
          %v995 = vunpack.c.l.b16 %v866
          %v996 = vunpack.c.l.b16 %v867
          %v997 = vunpack.c.l.b16 %v868
          %v998 = vunpack.c.l.b16 %v869
          %v999 = vunpack.c.l.b16 %v870
          %v1000 = vunpack.c.l.b16 %v871
          %v1001 = vunpack.c.l.b16 %v872
          %v1002 = vunpack.c.l.b16 %v873
          %v1003 = vunpack.c.l.b16 %v874
          %v1004 = vunpack.c.l.b16 %v875
          %v1005 = vunpack.c.l.b16 %v876
          %v1006 = vunpack.c.l.b16 %v877
          %v1007 = vunpack.c.l.b16 %v878
          %v1008 = vunpack.c.l.b16 %v879
          %v1009 = vunpack.c.l.b16 %v880
          %v1010 = vunpack.c.l.b16 %v881
          %v1011 = vunpack.c.l.b16 %v882
          %v1012 = vunpack.c.l.b16 %v883
          %v1013 = vunpack.c.l.b16 %v884
          %v1014 = vunpack.c.l.b16 %v885
          %v1015 = vunpack.c.l.b16 %v886
          %v1016 = vunpack.c.l.b16 %v887
          %v1017 = vunpack.c.l.b16 %v888
          %v1018 = vunpack.c.l.b16 %v889
          %v1019 = vunpack.c.l.b16 %v890
          %v1020 = vunpack.c.l.b16 %v891
          %v1021 = vunpack.c.l.b16 %v892
          %v1022 = vunpack.c.l.b16 %v893
          %v1023 = vunpack.c.l.b16 %v894
          %v1024 = vunpack.c.l.b16 %v895
          %v1025 = vunpack.c.l.b16 %v896
          %v1026 = vunpack.c.l.b16 %v897
          %v1027 = vunpack.c.l.b16 %v898
          %v1028 = vunpack.c.l.b16 %v899
          %v1029 = vunpack.c.l.b16 %v900
          %v1030 = vunpack.c.l.b16 %v901
          %v1031 = vunpack.c.l.b16 %v902
          %v1032 = vunpack.c.l.b16 %v903
          %v1033 = vunpack.c.l.b16 %v904
          %v1034 = vunpack.c.l.b16 %v905
          %v1035 = vunpack.c.l.b16 %v906
          %v1036 = vunpack.c.l.b16 %v907
          %v1037 = vunpack.c.l.b16 %v908
          %v1038 = vunpack.c.l.b16 %v909
          %v1039 = vunpack.c.l.b16 %v910
          %v1040 = vunpack.c.l.b16 %v911
          %v1041 = vpack.c.b16 %v978, %v977
          %v1042 = vpack.c.b16 %v980, %v979
          %v1043 = vpack.c.b16 %v982, %v981
          %v1044 = vpack.c.b16 %v984, %v983
          %v1045 = vpack.c.b16 %v986, %v985
          %v1046 = vpack.c.b16 %v988, %v987
          %v1047 = vpack.c.b16 %v990, %v989
          %v1048 = vpack.c.b16 %v992, %v991
          %v1049 = vpack.c.b16 %v994, %v993
          %v1050 = vpack.c.b16 %v996, %v995
          %v1051 = vpack.c.b16 %v998, %v997
          %v1052 = vpack.c.b16 %v1000, %v999
          %v1053 = vpack.c.b16 %v1002, %v1001
          %v1054 = vpack.c.b16 %v1004, %v1003
          %v1055 = vpack.c.b16 %v1006, %v1005
          %v1056 = vpack.c.b16 %v1008, %v1007
          %v1057 = vpack.c.b16 %v1010, %v1009
          %v1058 = vpack.c.b16 %v1012, %v1011
          %v1059 = vpack.c.b16 %v1014, %v1013
          %v1060 = vpack.c.b16 %v1016, %v1015
          %v1061 = vpack.c.b16 %v1018, %v1017
          %v1062 = vpack.c.b16 %v1020, %v1019
          %v1063 = vpack.c.b16 %v1022, %v1021
          %v1064 = vpack.c.b16 %v1024, %v1023
          %v1065 = vpack.c.b16 %v1026, %v1025
          %v1066 = vpack.c.b16 %v1028, %v1027
          %v1067 = vpack.c.b16 %v1030, %v1029
          %v1068 = vpack.c.b16 %v1032, %v1031
          %v1069 = vpack.c.b16 %v1034, %v1033
          %v1070 = vpack.c.b16 %v1036, %v1035
          %v1071 = vpack.c.b16 %v1038, %v1037
          %v1072 = vpack.c.b16 %v1040, %v1039
          %1105 = vmatprep.subr.bf16.mxu0 0
          %1106 = vmatpush1.bf16.msra.mxu0 %v1041
          %1107 = vmatprep.subr.bf16.mxu0 0
          %1108 = vmatpush1.bf16.msra.mxu0 %v1042
          %1109 = vmatprep.subr.bf16.mxu0 0
          %1110 = vmatpush1.bf16.msra.mxu0 %v1043
          %1111 = vmatprep.subr.bf16.mxu0 0
          %1112 = vmatpush1.bf16.msra.mxu0 %v1044
          %1113 = vmatprep.subr.bf16.mxu0 0
          %1114 = vmatpush1.bf16.msra.mxu0 %v1045
          %1115 = vmatprep.subr.bf16.mxu0 0
          %1116 = vmatpush1.bf16.msra.mxu0 %v1046
          %1117 = vmatprep.subr.bf16.mxu0 0
          %1118 = vmatpush1.bf16.msra.mxu0 %v1047
          %1119 = vmatprep.subr.bf16.mxu0 0
          %1120 = vmatpush1.bf16.msra.mxu0 %v1048
          %1121 = vmatprep.subr.bf16.mxu0 0
          %1122 = vmatpush1.bf16.msra.mxu0 %v1049
          %1123 = vmatprep.subr.bf16.mxu0 0
          %1124 = vmatpush1.bf16.msra.mxu0 %v1050
          %1125 = vmatprep.subr.bf16.mxu0 0
          %1126 = vmatpush1.bf16.msra.mxu0 %v1051
          %1127 = vmatprep.subr.bf16.mxu0 0
          %1128 = vmatpush1.bf16.msra.mxu0 %v1052
          %1129 = vmatprep.subr.bf16.mxu0 0
          %1130 = vmatpush1.bf16.msra.mxu0 %v1053
          %1131 = vmatprep.subr.bf16.mxu0 0
          %1132 = vmatpush1.bf16.msra.mxu0 %v1054
          %1133 = vmatprep.subr.bf16.mxu0 0
          %1134 = vmatpush1.bf16.msra.mxu0 %v1055
          %1135 = vmatprep.subr.bf16.mxu0 0
          %1136 = vmatpush1.bf16.msra.mxu0 %v1056
          %1137 = vmatprep.mubr.bf16.mxu0 %v845
          %1138 = vmatmul.mubr.bf16.gmra.mrb[0].mxu0 %v844
          %v1139 = vpop.f32.mrb[0].mxu0
          %v1140 = vadd.f32 %v912, %v1139
          %v1141 = vpop.f32.mrb[0].mxu0
          %v1142 = vpop.f32.mrb[0].mxu0
          %v1143 = vpop.f32.mrb[0].mxu0
          %1144 = vdwg.mxu0
          %1145 = vmatprep.subr.bf16.mxu0 0
          %1146 = vmatpush1.bf16.msra.mxu0 %v1057
          %1147 = vmatprep.subr.bf16.mxu0 0
          %1148 = vmatpush1.bf16.msra.mxu0 %v1058
          %1149 = vmatprep.subr.bf16.mxu0 0
          %1150 = vmatpush1.bf16.msra.mxu0 %v1059
          %1151 = vmatprep.subr.bf16.mxu0 0
          %1152 = vmatpush1.bf16.msra.mxu0 %v1060
          %1153 = vmatprep.subr.bf16.mxu0 0
          %1154 = vmatpush1.bf16.msra.mxu0 %v1061
          %1155 = vmatprep.subr.bf16.mxu0 0
          %1156 = vmatpush1.bf16.msra.mxu0 %v1062
          %1157 = vmatprep.subr.bf16.mxu0 0
          %1158 = vmatpush1.bf16.msra.mxu0 %v1063
          %1159 = vmatprep.subr.bf16.mxu0 0
          %1160 = vmatpush1.bf16.msra.mxu0 %v1064
          %1161 = vmatprep.subr.bf16.mxu0 0
          %1162 = vmatpush1.bf16.msra.mxu0 %v1065
          %1163 = vmatprep.subr.bf16.mxu0 0
          %1164 = vmatpush1.bf16.msra.mxu0 %v1066
          %1165 = vmatprep.subr.bf16.mxu0 0
          %1166 = vmatpush1.bf16.msra.mxu0 %v1067
          %1167 = vmatprep.subr.bf16.mxu0 0
          %1168 = vmatpush1.bf16.msra.mxu0 %v1068
          %1169 = vmatprep.subr.bf16.mxu0 0
          %1170 = vmatpush1.bf16.msra.mxu0 %v1069
          %1171 = vmatprep.subr.bf16.mxu0 0
          %1172 = vmatpush1.bf16.msra.mxu0 %v1070
          %1173 = vmatprep.subr.bf16.mxu0 0
          %1174 = vmatpush1.bf16.msra.mxu0 %v1071
          %1175 = vmatprep.subr.bf16.mxu0 0
          %1176 = vmatpush1.bf16.msra.mxu0 %v1072
          %1177 = vmatprep.mubr.bf16.mxu0 %v847
          %1178 = vmatmul.mubr.bf16.gmra.mrb[0].mxu0 %v846
          %v1179 = vpop.f32.mrb[0].mxu0
          %v1180 = vadd.f32 %v1140, %v1179
          %v1181 = vpop.f32.mrb[0].mxu0
          %v1182 = vpop.f32.mrb[0].mxu0
          %v1183 = vpop.f32.mrb[0].mxu0
          %1184 = vdwg.mxu0
          %v1185 = vpack.c.bf16 %v1180, %v1180
          %v1186 = vld [vmem:[%s7] sm:$0xf]
          %v1187 = vld [vmem:[%s7 + $0x4] sm:$0xf]
          %v1188 = vld [vmem:[%s7 + $0x8] sm:$0xf]
          %v1189 = vld [vmem:[%s7 + $0xc] sm:$0xf]
          %v1190 = vld [vmem:[%s7 + $0x10] sm:$0xf]
          %v1191 = vld [vmem:[%s7 + $0x14] sm:$0xf]
          %v1192 = vld [vmem:[%s7 + $0x18] sm:$0xf]
          %v1193 = vld [vmem:[%s7 + $0x1c] sm:$0xf]
          %v1194 = vld [vmem:[%s8] sm:$0x1]
          %v1203 = vunpack.c.l.b16 %v1186
          %v1204 = vunpack.c.l.b16 %v1187
          %v1205 = vunpack.c.l.b16 %v1188
          %v1206 = vunpack.c.l.b16 %v1189
          %v1207 = vunpack.c.l.b16 %v1190
          %v1208 = vunpack.c.l.b16 %v1191
          %v1209 = vunpack.c.l.b16 %v1192
          %v1210 = vunpack.c.l.b16 %v1193
          %v1211 = vpack.c.b16 %v1204, %v1203
          %v1212 = vpack.c.b16 %v1206, %v1205
          %v1213 = vpack.c.b16 %v1208, %v1207
          %v1214 = vpack.c.b16 %v1210, %v1209
          %v1220 = vsel %vm523, %v1185, 0
          %1222 = vmatprep.subr.bf16.mxu0 0
          %1223 = vmatpush1.bf16.msra.mxu0 %v1211
          %1224 = vmatprep.subr.bf16.mxu0 0
          %1225 = vmatpush1.bf16.msra.mxu0 %v1212
          %1226 = vmatprep.subr.bf16.mxu0 0
          %1227 = vmatpush1.bf16.msra.mxu0 %v1213
          %1228 = vmatprep.subr.bf16.mxu0 0
          %1229 = vmatpush1.bf16.msra.mxu0 %v1214
          %1230 = vmatprep.subr.bf16.mxu0 0
          %1231 = vmatpush1.bf16.msra.mxu0 0
          %1232 = vmatprep.subr.bf16.mxu0 0
          %1233 = vmatpush1.bf16.msra.mxu0 0
          %1234 = vmatprep.subr.bf16.mxu0 0
          %1235 = vmatpush1.bf16.msra.mxu0 0
          %1236 = vmatprep.subr.bf16.mxu0 0
          %1237 = vmatpush1.bf16.msra.mxu0 0
          %1238 = vmatprep.subr.bf16.mxu0 0
          %1239 = vmatpush1.bf16.msra.mxu0 0
          %1240 = vmatprep.subr.bf16.mxu0 0
          %1241 = vmatpush1.bf16.msra.mxu0 0
          %1242 = vmatprep.subr.bf16.mxu0 0
          %1243 = vmatpush1.bf16.msra.mxu0 0
          %1244 = vmatprep.subr.bf16.mxu0 0
          %1245 = vmatpush1.bf16.msra.mxu0 0
          %1246 = vmatprep.subr.bf16.mxu0 0
          %1247 = vmatpush1.bf16.msra.mxu0 0
          %1248 = vmatprep.subr.bf16.mxu0 0
          %1249 = vmatpush1.bf16.msra.mxu0 0
          %1250 = vmatprep.subr.bf16.mxu0 0
          %1251 = vmatpush1.bf16.msra.mxu0 0
          %1252 = vmatprep.subr.bf16.mxu0 0
          %1253 = vmatpush1.bf16.msra.mxu0 0
          %1254 = vmatprep.mubr.bf16.mxu0 0
          %1255 = vmatmul.mubr.bf16.gmra.mrb[0].mxu0 %v1220
          %v1256 = vpop.f32.mrb[0].mxu0
          %v1257 = vadd.f32 %v1194, %v1256
          %v1258 = vpop.f32.mrb[0].mxu0
          %v1259 = vpop.f32.mrb[0].mxu0
          %v1260 = vpop.f32.mrb[0].mxu0
          %1261 = vdwg.mxu0
          %v1262 = vpack.c.bf16 %v1257, %v1257
          %v1263 = vld [vmem:[%s9] sm:$0xf]
          %v1264 = vld [vmem:[%s9 + $0x4] sm:$0xf]
          %v1265 = vld [vmem:[%s9 + $0x8] sm:$0xf]
          %v1266 = vld [vmem:[%s9 + $0xc] sm:$0xf]
          %v1267 = vld [vmem:[%s9 + $0x10] sm:$0xf]
          %v1268 = vld [vmem:[%s9 + $0x14] sm:$0xf]
          %v1269 = vld [vmem:[%s9 + $0x18] sm:$0xf]
          %v1270 = vld [vmem:[%s9 + $0x1c] sm:$0xf]
          %v1271 = vld [vmem:[%s9 + $0x20] sm:$0xf]
          %v1272 = vld [vmem:[%s9 + $0x24] sm:$0xf]
          %v1273 = vld [vmem:[%s9 + $0x28] sm:$0xf]
          %v1274 = vld [vmem:[%s9 + $0x2c] sm:$0xf]
          %v1275 = vld [vmem:[%s9 + $0x30] sm:$0xf]
          %v1276 = vld [vmem:[%s9 + $0x34] sm:$0xf]
          %v1277 = vld [vmem:[%s9 + $0x38] sm:$0xf]
          %v1278 = vld [vmem:[%s9 + $0x3c] sm:$0xf]
          %v1279 = vld [vmem:[%s10] sm:$0x1]
          %v1296 = vunpack.c.l.b16 %v1263
          %v1297 = vunpack.c.l.b16 %v1264
          %v1298 = vunpack.c.l.b16 %v1265
          %v1299 = vunpack.c.l.b16 %v1266
          %v1300 = vunpack.c.l.b16 %v1267
          %v1301 = vunpack.c.l.b16 %v1268
          %v1302 = vunpack.c.l.b16 %v1269
          %v1303 = vunpack.c.l.b16 %v1270
          %v1304 = vunpack.c.l.b16 %v1271
          %v1305 = vunpack.c.l.b16 %v1272
          %v1306 = vunpack.c.l.b16 %v1273
          %v1307 = vunpack.c.l.b16 %v1274
          %v1308 = vunpack.c.l.b16 %v1275
          %v1309 = vunpack.c.l.b16 %v1276
          %v1310 = vunpack.c.l.b16 %v1277
          %v1311 = vunpack.c.l.b16 %v1278
          %v1312 = vpack.c.b16 %v1297, %v1296
          %v1313 = vpack.c.b16 %v1299, %v1298
          %v1314 = vpack.c.b16 %v1301, %v1300
          %v1315 = vpack.c.b16 %v1303, %v1302
          %v1316 = vpack.c.b16 %v1305, %v1304
          %v1317 = vpack.c.b16 %v1307, %v1306
          %v1318 = vpack.c.b16 %v1309, %v1308
          %v1319 = vpack.c.b16 %v1311, %v1310
          %1328 = vmatprep.subr.bf16.mxu0 0
          %1329 = vmatpush1.bf16.msra.mxu0 %v1312
          %1330 = vmatprep.subr.bf16.mxu0 0
          %1331 = vmatpush1.bf16.msra.mxu0 %v1313
          %1332 = vmatprep.subr.bf16.mxu0 0
          %1333 = vmatpush1.bf16.msra.mxu0 %v1314
          %1334 = vmatprep.subr.bf16.mxu0 0
          %1335 = vmatpush1.bf16.msra.mxu0 %v1315
          %1336 = vmatprep.subr.bf16.mxu0 0
          %1337 = vmatpush1.bf16.msra.mxu0 %v1316
          %1338 = vmatprep.subr.bf16.mxu0 0
          %1339 = vmatpush1.bf16.msra.mxu0 %v1317
          %1340 = vmatprep.subr.bf16.mxu0 0
          %1341 = vmatpush1.bf16.msra.mxu0 %v1318
          %1342 = vmatprep.subr.bf16.mxu0 0
          %1343 = vmatpush1.bf16.msra.mxu0 %v1319
          %1344 = vmatprep.subr.bf16.mxu0 0
          %1345 = vmatpush1.bf16.msra.mxu0 0
          %1346 = vmatprep.subr.bf16.mxu0 0
          %1347 = vmatpush1.bf16.msra.mxu0 0
          %1348 = vmatprep.subr.bf16.mxu0 0
          %1349 = vmatpush1.bf16.msra.mxu0 0
          %1350 = vmatprep.subr.bf16.mxu0 0
          %1351 = vmatpush1.bf16.msra.mxu0 0
          %1352 = vmatprep.subr.bf16.mxu0 0
          %1353 = vmatpush1.bf16.msra.mxu0 0
          %1354 = vmatprep.subr.bf16.mxu0 0
          %1355 = vmatpush1.bf16.msra.mxu0 0
          %1356 = vmatprep.subr.bf16.mxu0 0
          %1357 = vmatpush1.bf16.msra.mxu0 0
          %1358 = vmatprep.subr.bf16.mxu0 0
          %1359 = vmatpush1.bf16.msra.mxu0 0
          %1360 = vmatprep.mubr.bf16.mxu0 0
          %1361 = vmatmul.mubr.bf16.gmra.mrb[0].mxu0 %v1262
          %v1362 = vpop.f32.mrb[0].mxu0
          %v1363 = vadd.f32 %v1279, %v1362
          %v1364 = vpop.f32.mrb[0].mxu0
          %v1365 = vpop.f32.mrb[0].mxu0
          %v1366 = vpop.f32.mrb[0].mxu0
          %1367 = vdwg.mxu0
          %1368 = vst [vmem:[%s438] sm:$0x1] %v1257
          %1369 = vst [vmem:[%s432] sm:$0x1] %v1363
        $region72: #{efficientnet_centerloss_forward.1} parent=63 // pred_fallthru
          _
        %s1370 = sand.u32 %s288, 1
        %s1371 = scalar_lea.sflag [#allocation4], %s1370
        %s1372 = sand.u32 %s288, 1
        %s1373 = scalar_lea.vmem [#allocation3], %s1372
        %s1374 = sand.u32 %s314, 1
        %s1375 = scalar_lea.sflag [#allocation6], %s1374
        %s1376 = sand.u32 %s314, 1
        %s1377 = scalar_lea.vmem [#allocation5], %s1376
        // Predicated region
        $region73: #{efficientnet_centerloss_forward.1} parent=63 // pred_check
          %p1378 = pneg %p298
        $region74: #{efficientnet_centerloss_forward.1} parent=63 // pred_check_branch
          %1380 = sbr.rel (%p1378) target = $region76
        $region75: #{efficientnet_centerloss_forward.1} parent=63 // pred_region
          %s1382 = ssub.s32 16, 16
          %1383 = vsyncadd %s1371, %s1382
          %s1384 = smul.addr %s34, 16
          %s1385 = scalar_lea.hbm %s11, %s1384
          %s1387 = sshll.u32 %s1373, 4
          %s1388 = int_to_ptr.vmem [resolvable:$true] %s1387
          %1390 = dma.vmem_to_hbm [thread:$0]  %s1388, 16, %s1385, %s1371
        $region76: #{efficientnet_centerloss_forward.1} parent=63 // pred_fallthru
          _
        // Predicated region
        $region77: #{efficientnet_centerloss_forward.1} parent=63 // pred_check
          %p1391 = pneg %p324
        $region78: #{efficientnet_centerloss_forward.1} parent=63 // pred_check_branch
          %1393 = sbr.rel (%p1391) target = $region80
        $region79: #{efficientnet_centerloss_forward.1} parent=63 // pred_region
          %s1395 = ssub.s32 16, 16
          %1396 = vsyncadd %s1375, %s1395
          %s1397 = smul.addr %s34, 16
          %s1398 = scalar_lea.hbm %s12, %s1397
          %s1400 = sshll.u32 %s1377, 4
          %s1401 = int_to_ptr.vmem [resolvable:$true] %s1400
          %1403 = dma.vmem_to_hbm [thread:$0]  %s1401, 16, %s1398, %s1375
        $region80: #{efficientnet_centerloss_forward.1} parent=63 // pred_fallthru
          _
      $region64: #{efficientnet_centerloss_forward.1} parent=5 // pred_fallthru
        _
      %p1404 = scmp.le.s32.totalorder 2, %s25
      // Predicated region
      $region81: #{efficientnet_centerloss_forward.1} parent=5 // pred_check
        %p1405 = pneg %p1404
      $region82: #{efficientnet_centerloss_forward.1} parent=5 // pred_check_branch
        %1407 = sbr.rel (%p1405) target = $region84
      $region83: #{efficientnet_centerloss_forward.1} parent=5 // pred_region
        %s1408 = ssub.s32 %s25, 2
        // Predicated region
        $region85: #{efficientnet_centerloss_forward.1} parent=83 // pred_check
          %p1409 = pneg %p304
        $region86: #{efficientnet_centerloss_forward.1} parent=83 // pred_check_branch
          %1411 = sbr.rel (%p1409) target = $region88
        $region87: #{efficientnet_centerloss_forward.1} parent=83 // pred_region
          %s1412 = sand.u32 %s289, 1
          %s1413 = scalar_lea.sflag [#allocation4], %s1412
          %s1414 = sand.u32 %s289, 1
          %s1415 = scalar_lea.vmem [#allocation3], %s1414
          %1416 = dma.done %s1413, 16
        $region88: #{efficientnet_centerloss_forward.1} parent=83 // pred_fallthru
          _
        // Predicated region
        $region89: #{efficientnet_centerloss_forward.1} parent=83 // pred_check
          %p1417 = pneg %p330
        $region90: #{efficientnet_centerloss_forward.1} parent=83 // pred_check_branch
          %1419 = sbr.rel (%p1417) target = $region92
        $region91: #{efficientnet_centerloss_forward.1} parent=83 // pred_region
          %s1420 = sand.u32 %s315, 1
          %s1421 = scalar_lea.sflag [#allocation6], %s1420
          %s1422 = sand.u32 %s315, 1
          %s1423 = scalar_lea.vmem [#allocation5], %s1422
          %1424 = dma.done %s1421, 16
        $region92: #{efficientnet_centerloss_forward.1} parent=83 // pred_fallthru
          _
      $region84: #{efficientnet_centerloss_forward.1} parent=5 // pred_fallthru
        _
    $region6: #{efficientnet_centerloss_forward.1} parent=1 // loop_footer
      %s29 = sadd.s32 1, %s25
    $region7: #{efficientnet_centerloss_forward.1} parent=1 // loop_footer_branch
      %24 = sbr.rel target = $region3
    $region8: #{efficientnet_centerloss_forward.1} parent=1 // loop_exit
      _
    %1425 = vsyncpa [#allocation4], 1
    %s1426 = scalar_lea.sflag [#allocation4], 1
    %1427 = vsyncpa %s1426, 1
    %1428 = vsyncpa [#allocation6], 1
    %s1429 = scalar_lea.sflag [#allocation6], 1
    %1430 = vsyncpa %s1429, 1

</llo_original>
